<compile_context>
chip_gen: v6e
topology: v6e:2x2x1
jax: 0.10.0
libtpu: 0.0.40
codegen_flags: <defaults>
</compile_context>

<pallas_src>
import functools

import jax
import jax.numpy as jnp
from jax import lax
from jax.experimental import pallas as pl
from jax.experimental.pallas import tpu as pltpu

_LANE = 128
_BN_EPS = 1e-5


def _bn_channels(zf, gamma_row, beta_row, fold, unfold, cnt):
    """Training-mode BatchNorm in the channel-major (N, KH) layout.

    Every hidden feature appears k times along the lane dim (once per random
    channel); `fold` (KH, H) sums those copies (and drops pad lanes), `unfold`
    (H, KH) broadcasts per-feature scale/shift back to every copy.
    Fused single-pass moments: var = E[z^2] - E[z]^2 (f32, clamped at 0).
    """
    s1 = jnp.sum(zf, axis=0, keepdims=True)                      # (1, KH)
    s2 = jnp.sum(zf * zf, axis=0, keepdims=True)                 # (1, KH)
    s1h = jnp.dot(s1, fold, preferred_element_type=jnp.float32)  # (1, H)
    s2h = jnp.dot(s2, fold, preferred_element_type=jnp.float32)  # (1, H)
    mu = s1h / cnt
    var = jnp.maximum(s2h / cnt - mu * mu, 0.0)
    scale_h = gamma_row * lax.rsqrt(var + _BN_EPS)               # (1, H)
    shift_h = beta_row - mu * scale_h                            # (1, H)
    scale = jnp.dot(scale_h, unfold, preferred_element_type=jnp.float32)
    shift = jnp.dot(shift_h, unfold, preferred_element_type=jnp.float32)
    return zf * scale + shift


def pearl_kernel(x_ref, adj_ref, ew0_ref, wr_ref, wout_ref, eps_ref,
                 gamma_ref, beta_ref, gout_ref, bout_ref, fold_ref, unfold_ref,
                 out_ref, *scratch, n_layer, k, kh, resident, tm):
    n = x_ref.shape[0]
    cnt = jnp.float32(n * k)
    fold = fold_ref[...]          # (KH, H) 0/1 channel-fold matrix
    unfold = unfold_ref[...]      # (H, KH) its transpose

    if resident:
        h_ref, acc_ref = scratch
    else:
        h_ref, acc_ref, agg_ref, adj_buf, sem = scratch
        n_tiles = n // tm

    def aggregate(h_bf):
        """A @ h -> (n, KH) f32.  A is either VMEM-resident bf16 (loaded once
        by the in_spec) or streamed from HBM as int8 row tiles with a manual
        double buffer and widened to bf16 after each DMA."""
        if resident:
            return jnp.dot(adj_ref[...], h_bf,
                           preferred_element_type=jnp.float32)

        def fetch(t, slot):
            pltpu.make_async_copy(adj_ref.at[t], adj_buf.at[slot],
                                  sem.at[slot]).start()

        fetch(0, 0)

        @pl.loop(0, n_tiles)
        def _(t):
            slot = t & 1
            pltpu.make_async_copy(adj_ref.at[t], adj_buf.at[slot],
                                  sem.at[slot]).wait()

            @pl.when(t + 1 < n_tiles)
            def _():
                fetch(t + 1, 1 - slot)

            row = pl.multiple_of(t * tm, tm)
            a_bf = adj_buf[slot].astype(jnp.bfloat16)   # int8 -> bf16 in VMEM
            agg_ref[pl.ds(row, tm), :] = jnp.dot(
                a_bf, h_bf, preferred_element_type=jnp.float32)

        # TODO(synk): prefetch the next layer's tile 0 during the BN epilogue.
        return agg_ref[...]

    def layer_step(l, apply_wr):
        """One GIN layer in the (n, KH) layout; returns h_l @ Wout_l."""
        eps_l = eps_ref[l]            # SMEM scalar, read before any DMA wait
        g = gamma_ref[l]              # (1, H)
        b = beta_ref[l]               # (1, H)
        h_bf = h_ref[...]                                         # (n, KH) bf16
        pre = aggregate(h_bf) + (1.0 + eps_l) * h_bf.astype(jnp.float32)
        if apply_wr:
            pre = jnp.dot(pre.astype(jnp.bfloat16), wr_ref[l - 1],
                          preferred_element_type=jnp.float32)
        hl = jnp.maximum(_bn_channels(pre, g, b, fold, unfold, cnt), 0.0)
        hl_bf = hl.astype(jnp.bfloat16)
        h_ref[...] = hl_bf                                        # stays bf16
        # Fused skip-connection concat + output_encoder contribution.
        return jnp.dot(hl_bf, wout_ref[l], preferred_element_type=jnp.float32)

    # Layer 0: the (1 -> H) linear (no bias) commutes with the aggregation, so
    # apply it up-front as x @ (I_k (x) w0); every layer then shares one path.
    h_ref[...] = jnp.dot(x_ref[...], ew0_ref[...],
                         preferred_element_type=jnp.float32).astype(jnp.bfloat16)
    acc_ref[...] = layer_step(0, apply_wr=False)    # init acc from the l=0 dot

    def body(l, carry):
        acc_ref[...] += layer_step(l, apply_wr=True)
        return carry

    lax.fori_loop(1, n_layer, body, 0)

    # output_norm + mean over the k random channels (sign-invariant readout).
    z = _bn_channels(acc_ref[...], gout_ref[...], bout_ref[...],
                     fold, unfold, cnt)
    out_ref[...] = jnp.dot(z, fold,
                           preferred_element_type=jnp.float32) * (1.0 / k)


def _round_up(v, m):
    return ((v + m - 1) // m) * m


def _pad_to(a, shape):
    return jnp.pad(a, [(0, t - s) for s, t in zip(a.shape, shape)])


def _block_diag_k(w, k, kh):
    """kron(I_k, w), zero-padded to (kh, kh)."""
    return _pad_to(jnp.kron(jnp.eye(k, dtype=w.dtype), w), (kh, kh))


def _tpu_vmem_bytes():
    try:
        return int(pltpu.get_tpu_info().vmem_capacity_bytes)
    except Exception:
        return 64 * 1024 * 1024     # conservative per-core fallback (v7x-like)


def pearl_forward(x, adj, params, *, row_tile=512):
    """x: (n, k, 1) random node features; adj: (n, n) dense 0/1 adjacency."""
    n, k, d_in = x.shape
    assert d_in == 1
    n_layer, n_hid = params["gamma"].shape
    kh = _round_up(k * n_hid, _LANE)      # lane-dense channel-major width

    # ---- host-side layout prep (once per call, outside the kernel) ----
    x2 = x[:, :, 0]                                               # (n, k) f32
    w0 = params["w0"]                                             # (1, H)
    ew0 = _pad_to(jnp.kron(jnp.eye(k, dtype=w0.dtype), w0), (k, kh))
    fold = _pad_to(jnp.kron(jnp.ones((k, 1), jnp.float32),
                            jnp.eye(n_hid, dtype=jnp.float32)), (kh, n_hid))
    unfold = fold.T                                               # (H, KH)
    if n_layer > 1:
        wr_bd = jnp.stack([_block_diag_k(params["wr"][l], k, kh)
                           for l in range(n_layer - 1)]).astype(jnp.bfloat16)
    else:
        wr_bd = jnp.zeros((1, kh, kh), jnp.bfloat16)
    wout = params["wout"].reshape(n_layer, n_hid, n_hid)
    wout_bd = jnp.stack([_block_diag_k(wout[l], k, kh)
                         for l in range(n_layer)]).astype(jnp.bfloat16)
    gamma3 = params["gamma"].reshape(n_layer, 1, n_hid)
    beta3 = params["beta"].reshape(n_layer, 1, n_hid)

    # ---- per-generation VMEM budget & adjacency residency decision ----
    phys = _tpu_vmem_bytes()
    budget = int(phys * 0.85)             # headroom for compiler scratch
    weight_bytes = (int(wr_bd.size) + int(wout_bd.size)) * 2 \
        + (int(ew0.size) + 2 * int(fold.size)) * 4
    act_bytes = n * kh * (2 + 4)          # h (bf16) + acc (f32) scratch
    tmp_bytes = 4 * n * kh * 4            # live f32 temporaries (pre / hl / dot)
    small_bytes = (n * k + n * n_hid + 6 * n_layer * n_hid) * 4
    base = weight_bytes + act_bytes + tmp_bytes + small_bytes
    resident = (base + 2 * n * n) <= budget

    if resident:
        adj_in = adj.astype(jnp.bfloat16)               # 0/1 -> exact
        adj_spec = pl.BlockSpec(memory_space=pltpu.MemorySpace.VMEM)
        scratch = [pltpu.VMEM((n, kh), jnp.bfloat16),   # h (resident, bf16)
                   pltpu.VMEM((n, kh), jnp.float32)]    # acc (skip/out encoder)
        tm = n
        vmem_est = base + 2 * n * n
    else:
        tm = n if n <= row_tile else row_tile
        # TODO(synk): pad / mask a ragged last adjacency row tile.
        assert n % tm == 0, "streaming path needs n to be a multiple of row_tile"
        adj_in = adj.astype(jnp.int8).reshape(n // tm, tm, n)   # 0/1 -> exact
        adj_spec = pl.BlockSpec(memory_space=pl.ANY)            # stays in HBM
        scratch = [pltpu.VMEM((n, kh), jnp.bfloat16),           # h
                   pltpu.VMEM((n, kh), jnp.float32),            # acc
                   pltpu.VMEM((n, kh), jnp.float32),            # agg result
                   pltpu.VMEM((2, tm, n), jnp.int8),            # adj DMA buffers
                   pltpu.SemaphoreType.DMA((2,))]
        vmem_est = base + n * kh * 4 + 2 * tm * n
    assert vmem_est <= budget, (
        f"PEARL kernel needs ~{vmem_est >> 20} MiB VMEM but only "
        f"{budget >> 20} MiB is available; shrink n/k/n_hid or tile activations")
    vmem_limit = int(min(max(2 * vmem_est, 32 << 20), budget))

    kernel = functools.partial(pearl_kernel, n_layer=n_layer, k=k, kh=kh,
                               resident=resident, tm=tm)
    vmem = pl.BlockSpec(memory_space=pltpu.MemorySpace.VMEM)
    smem = pl.BlockSpec(memory_space=pltpu.MemorySpace.SMEM)

    out = pl.pallas_call(
        kernel,
        out_shape=jax.ShapeDtypeStruct((n, n_hid), jnp.float32),
        in_specs=[vmem, adj_spec, vmem, vmem, vmem, smem,
                  vmem, vmem, vmem, vmem, vmem, vmem],
        out_specs=vmem,
        scratch_shapes=scratch,
        compiler_params=pltpu.CompilerParams(vmem_limit_bytes=vmem_limit),
    )(x2, adj_in, ew0, wr_bd, wout_bd, params["eps"], gamma3, beta3,
      params["gout"], params["bout"], fold, unfold)
    return out


def init_params(key, n_hid, n_layer):
    k0, k1, k2 = jax.random.split(key, 3)
    return dict(
        w0=jax.random.normal(k0, (1, n_hid), jnp.float32),
        wr=jax.random.normal(k1, (n_layer - 1, n_hid, n_hid), jnp.float32)
        / jnp.sqrt(jnp.float32(n_hid)),
        wout=jax.random.normal(k2, (n_layer * n_hid, n_hid), jnp.float32)
        / jnp.sqrt(jnp.float32(n_layer * n_hid)),
        eps=jnp.zeros((n_layer,), jnp.float32),          # GIN eps (fixed 0)
        gamma=jnp.ones((n_layer, n_hid), jnp.float32),   # MaskedBN weight
        beta=jnp.zeros((n_layer, n_hid), jnp.float32),   # MaskedBN bias
        gout=jnp.ones((1, n_hid), jnp.float32),
        bout=jnp.zeros((1, n_hid), jnp.float32),
    )


def pearl_ref(x, adj, p):
    """Pure-JAX f32 reference of the same forward, for correctness check."""
    n_layer, n_hid = p["gamma"].shape
    h = x
    skips = []
    for l in range(n_layer):
        agg = jnp.einsum("ij,jkd->ikd", adj, h)
        pre = agg + (1.0 + p["eps"][l]) * h
        w = p["w0"] if l == 0 else p["wr"][l - 1]
        z = jnp.einsum("nkd,dh->nkh", pre, w)
        mu = z.mean(axis=(0, 1), keepdims=True)
        var = jnp.square(z - mu).mean(axis=(0, 1), keepdims=True)
        z = (z - mu) / jnp.sqrt(var + 1e-5) * p["gamma"][l] + p["beta"][l]
        h = jax.nn.relu(z)
        skips.append(h)
    hc = jnp.concatenate(skips, axis=-1)
    z = jnp.einsum("nkd,dh->nkh", hc, p["wout"])
    mu = z.mean(axis=(0, 1), keepdims=True)
    var = jnp.square(z - mu).mean(axis=(0, 1), keepdims=True)
    z = (z - mu) / jnp.sqrt(var + 1e-5) * p["gout"][0] + p["bout"][0]
    return z.mean(axis=1)


if __name__ == "__main__":
    n, k, n_hid, nl_phi = 16, 8, 32, 3   # nodes, rand channels, hidden, layers

    key = jax.random.PRNGKey(0)
    kx, kp = jax.random.split(key)

    # PEARL input: rand node features, shape (n, k, 1) since GNN3d n_in = 1.
    x = jax.random.normal(kx, (n, k, 1), jnp.float32)

    # Deterministic graph: undirected ring on n nodes -> dense adjacency.
    idx = jnp.arange(n)
    adj = (
        jnp.zeros((n, n), jnp.float32)
        .at[idx, (idx + 1) % n].set(1.0)
        .at[(idx + 1) % n, idx].set(1.0)
    )

    params = init_params(kp, n_hid, nl_phi)

    out = pearl_forward(x, adj, params)
    jax.block_until_ready(out)

    ref = pearl_ref(x, adj, params)
    assert out.shape == (n, n_hid)
    # Tolerance reflects the intentional bf16 (f32-accum) matmul / bf16-resident
    # activation policy (adjacency cast is exact 0/1).
    assert jnp.allclose(out, ref, atol=5e-2, rtol=5e-2), (
        "max abs diff = %f" % float(jnp.max(jnp.abs(out - ref))))

    print("KERNEL_OK")
</pallas_src>

<mosaic_0001>
module attributes {stable_mosaic.version = 11 : i64} {
  func.func @pearl_kernel(%arg0: memref<16x8xf32, #tpu.memory_space<vmem>>, %arg1: memref<16x16xbf16, #tpu.memory_space<vmem>>, %arg2: memref<8x256xf32, #tpu.memory_space<vmem>>, %arg3: memref<2x256x256xbf16, #tpu.memory_space<vmem>>, %arg4: memref<3x256x256xbf16, #tpu.memory_space<vmem>>, %arg5: memref<3xf32, #tpu.memory_space<smem>>, %arg6: memref<3x1x32xf32, #tpu.memory_space<vmem>>, %arg7: memref<3x1x32xf32, #tpu.memory_space<vmem>>, %arg8: memref<1x32xf32, #tpu.memory_space<vmem>>, %arg9: memref<1x32xf32, #tpu.memory_space<vmem>>, %arg10: memref<256x32xf32, #tpu.memory_space<vmem>>, %arg11: memref<32x256xf32, #tpu.memory_space<vmem>>, %arg12: memref<16x32xf32, #tpu.memory_space<vmem>>, %arg13: memref<16x256xbf16, #tpu.memory_space<vmem>>, %arg14: memref<16x256xf32, #tpu.memory_space<vmem>>) attributes {dimension_semantics = [], scalar_prefetch = 0 : i64, scratch_operands = 2 : i64, tpu.core_type = #tpu.core_type<tc>} {
    %c0 = arith.constant 0 : index
    %c0_0 = arith.constant 0 : index
    %0 = vector.load %arg10[%c0, %c0_0] : memref<256x32xf32, #tpu.memory_space<vmem>>, vector<256x32xf32>
    %c0_1 = arith.constant 0 : index
    %c0_2 = arith.constant 0 : index
    %1 = vector.load %arg11[%c0_1, %c0_2] : memref<32x256xf32, #tpu.memory_space<vmem>>, vector<32x256xf32>
    %c0_3 = arith.constant 0 : index
    %c0_4 = arith.constant 0 : index
    %2 = vector.load %arg0[%c0_3, %c0_4] : memref<16x8xf32, #tpu.memory_space<vmem>>, vector<16x8xf32>
    %c0_5 = arith.constant 0 : index
    %c0_6 = arith.constant 0 : index
    %3 = vector.load %arg2[%c0_5, %c0_6] : memref<8x256xf32, #tpu.memory_space<vmem>>, vector<8x256xf32>
    %cst = arith.constant dense<0.000000e+00> : vector<16x256xf32>
    %4 = tpu.matmul %2, %3, %cst {dimension_numbers = #tpu.dot_dimension_numbers<[1], [0], [0], [1], [0, 0, 1, 1], [], []>} : vector<16x8xf32>, vector<8x256xf32>, vector<16x256xf32> -> vector<16x256xf32>
    %5 = arith.truncf %4 : vector<16x256xf32> to vector<16x256xbf16>
    %c0_7 = arith.constant 0 : index
    %c0_8 = arith.constant 0 : index
    %6 = vector.load %arg13[%c0_7, %c0_8] : memref<16x256xbf16, #tpu.memory_space<vmem>>, vector<16x256xbf16>
    tpu.vector_store %arg13[%c0_7, %c0_8], %5 {strides = array<i32>} : memref<16x256xbf16, #tpu.memory_space<vmem>>, vector<16x256xbf16>,
    %c0_9 = arith.constant 0 : index
    %7 = memref.load %arg5[%c0_9] : memref<3xf32, #tpu.memory_space<smem>>
    %c0_10 = arith.constant 0 : index
    %c0_11 = arith.constant 0 : index
    %c0_12 = arith.constant 0 : index
    %8 = vector.load %arg6[%c0_10, %c0_11, %c0_12] : memref<3x1x32xf32, #tpu.memory_space<vmem>>, vector<1x1x32xf32>
    %9 = vector.shape_cast %8 : vector<1x1x32xf32> to vector<1x32xf32>
    %c0_13 = arith.constant 0 : index
    %c0_14 = arith.constant 0 : index
    %c0_15 = arith.constant 0 : index
    %10 = vector.load %arg7[%c0_13, %c0_14, %c0_15] : memref<3x1x32xf32, #tpu.memory_space<vmem>>, vector<1x1x32xf32>
    %11 = vector.shape_cast %10 : vector<1x1x32xf32> to vector<1x32xf32>
    %c0_16 = arith.constant 0 : index
    %c0_17 = arith.constant 0 : index
    %12 = vector.load %arg13[%c0_16, %c0_17] : memref<16x256xbf16, #tpu.memory_space<vmem>>, vector<16x256xbf16>
    %c0_18 = arith.constant 0 : index
    %c0_19 = arith.constant 0 : index
    %13 = vector.load %arg1[%c0_18, %c0_19] : memref<16x16xbf16, #tpu.memory_space<vmem>>, vector<16x16xbf16>
    %cst_20 = arith.constant dense<0.000000e+00> : vector<16x256xf32>
    %14 = tpu.matmul %13, %12, %cst_20 {dimension_numbers = #tpu.dot_dimension_numbers<[1], [0], [0], [1], [0, 0, 1, 1], [], []>} : vector<16x16xbf16>, vector<16x256xbf16>, vector<16x256xf32> -> vector<16x256xf32>
    %cst_21 = arith.constant 1.000000e+00 : f32
    %15 = arith.addf %cst_21, %7 : f32
    %16 = arith.extf %12 : vector<16x256xbf16> to vector<16x256xf32>
    %17 = vector.broadcast %15 : f32 to vector<16x256xf32>
    %18 = arith.mulf %17, %16 : vector<16x256xf32>
    %19 = arith.addf %14, %18 : vector<16x256xf32>
    %cst_22 = arith.constant dense<0.000000e+00> : vector<256xf32>
    %20 = vector.multi_reduction <add>, %19, %cst_22 [0] : vector<16x256xf32> to vector<256xf32>
    %21 = vector.shape_cast %20 : vector<256xf32> to vector<1x256xf32>
    %22 = arith.mulf %19, %19 : vector<16x256xf32>
    %cst_23 = arith.constant dense<0.000000e+00> : vector<256xf32>
    %23 = vector.multi_reduction <add>, %22, %cst_23 [0] : vector<16x256xf32> to vector<256xf32>
    %24 = vector.shape_cast %23 : vector<256xf32> to vector<1x256xf32>
    %cst_24 = arith.constant dense<0.000000e+00> : vector<1x32xf32>
    %25 = tpu.matmul %21, %0, %cst_24 {dimension_numbers = #tpu.dot_dimension_numbers<[1], [0], [0], [1], [0, 0, 1, 1], [], []>} : vector<1x256xf32>, vector<256x32xf32>, vector<1x32xf32> -> vector<1x32xf32>
    %cst_25 = arith.constant dense<0.000000e+00> : vector<1x32xf32>
    %26 = tpu.matmul %24, %0, %cst_25 {dimension_numbers = #tpu.dot_dimension_numbers<[1], [0], [0], [1], [0, 0, 1, 1], [], []>} : vector<1x256xf32>, vector<256x32xf32>, vector<1x32xf32> -> vector<1x32xf32>
    %cst_26 = arith.constant 1.280000e+02 : f32
    %27 = vector.broadcast %cst_26 : f32 to vector<1x32xf32>
    %28 = arith.divf %25, %27 : vector<1x32xf32>
    %cst_27 = arith.constant 1.280000e+02 : f32
    %29 = vector.broadcast %cst_27 : f32 to vector<1x32xf32>
    %30 = arith.divf %26, %29 : vector<1x32xf32>
    %31 = arith.mulf %28, %28 : vector<1x32xf32>
    %32 = arith.subf %30, %31 : vector<1x32xf32>
    %cst_28 = arith.constant 0.000000e+00 : f32
    %33 = vector.broadcast %cst_28 : f32 to vector<1x32xf32>
    %34 = arith.maximumf %32, %33 : vector<1x32xf32>
    %cst_29 = arith.constant 9.99999974E-6 : f32
    %35 = vector.broadcast %cst_29 : f32 to vector<1x32xf32>
    %36 = arith.addf %34, %35 : vector<1x32xf32>
    %37 = math.rsqrt %36 : vector<1x32xf32>
    %38 = arith.mulf %9, %37 : vector<1x32xf32>
    %39 = arith.mulf %28, %38 : vector<1x32xf32>
    %40 = arith.subf %11, %39 : vector<1x32xf32>
    %cst_30 = arith.constant dense<0.000000e+00> : vector<1x256xf32>
    %41 = tpu.matmul %38, %1, %cst_30 {dimension_numbers = #tpu.dot_dimension_numbers<[1], [0], [0], [1], [0, 0, 1, 1], [], []>} : vector<1x32xf32>, vector<32x256xf32>, vector<1x256xf32> -> vector<1x256xf32>
    %cst_31 = arith.constant dense<0.000000e+00> : vector<1x256xf32>
    %42 = tpu.matmul %40, %1, %cst_31 {dimension_numbers = #tpu.dot_dimension_numbers<[1], [0], [0], [1], [0, 0, 1, 1], [], []>} : vector<1x32xf32>, vector<32x256xf32>, vector<1x256xf32> -> vector<1x256xf32>
    %43 = vector.broadcast %41 : vector<1x256xf32> to vector<16x256xf32>
    %44 = arith.mulf %19, %43 : vector<16x256xf32>
    %45 = vector.broadcast %42 : vector<1x256xf32> to vector<16x256xf32>
    %46 = arith.addf %44, %45 : vector<16x256xf32>
    %cst_32 = arith.constant 0.000000e+00 : f32
    %47 = vector.broadcast %cst_32 : f32 to vector<16x256xf32>
    %48 = arith.maximumf %46, %47 : vector<16x256xf32>
    %49 = arith.truncf %48 : vector<16x256xf32> to vector<16x256xbf16>
    %c0_33 = arith.constant 0 : index
    %c0_34 = arith.constant 0 : index
    %50 = vector.load %arg13[%c0_33, %c0_34] : memref<16x256xbf16, #tpu.memory_space<vmem>>, vector<16x256xbf16>
    tpu.vector_store %arg13[%c0_33, %c0_34], %49 {strides = array<i32>} : memref<16x256xbf16, #tpu.memory_space<vmem>>, vector<16x256xbf16>,
    %c0_35 = arith.constant 0 : index
    %c0_36 = arith.constant 0 : index
    %c0_37 = arith.constant 0 : index
    %51 = vector.load %arg4[%c0_35, %c0_36, %c0_37] : memref<3x256x256xbf16, #tpu.memory_space<vmem>>, vector<1x256x256xbf16>
    %52 = vector.shape_cast %51 : vector<1x256x256xbf16> to vector<256x256xbf16>
    %cst_38 = arith.constant dense<0.000000e+00> : vector<16x256xf32>
    %53 = tpu.matmul %49, %52, %cst_38 {dimension_numbers = #tpu.dot_dimension_numbers<[1], [0], [0], [1], [0, 0, 1, 1], [], []>} : vector<16x256xbf16>, vector<256x256xbf16>, vector<16x256xf32> -> vector<16x256xf32>
    %c0_39 = arith.constant 0 : index
    %c0_40 = arith.constant 0 : index
    %54 = vector.load %arg14[%c0_39, %c0_40] : memref<16x256xf32, #tpu.memory_space<vmem>>, vector<16x256xf32>
    tpu.vector_store %arg14[%c0_39, %c0_40], %53 {strides = array<i32>} : memref<16x256xf32, #tpu.memory_space<vmem>>, vector<16x256xf32>,
    %cst_41 = arith.constant 1.280000e+02 : f32
    %c1_i32 = arith.constant 1 : i32
    %c2_i32 = arith.constant 2 : i32
    %55 = arith.addi %c1_i32, %c2_i32 : i32
    %c1_i32_42 = arith.constant 1 : i32
    scf.for %arg15 = %c1_i32 to %55 step %c1_i32_42  : i32 {
      %c0_64 = arith.constant 0 : index
      %c0_65 = arith.constant 0 : index
      %90 = vector.load %arg14[%c0_64, %c0_65] : memref<16x256xf32, #tpu.memory_space<vmem>>, vector<16x256xf32>
      %91 = arith.index_cast %arg15 : i32 to index
      %92 = memref.load %arg5[%91] : memref<3xf32, #tpu.memory_space<smem>>
      %93 = arith.index_cast %arg15 : i32 to index
      %c0_66 = arith.constant 0 : index
      %c0_67 = arith.constant 0 : index
      %94 = vector.load %arg6[%93, %c0_66, %c0_67] : memref<3x1x32xf32, #tpu.memory_space<vmem>>, vector<1x1x32xf32>
      %95 = vector.shape_cast %94 : vector<1x1x32xf32> to vector<1x32xf32>
      %96 = arith.index_cast %arg15 : i32 to index
      %c0_68 = arith.constant 0 : index
      %c0_69 = arith.constant 0 : index
      %97 = vector.load %arg7[%96, %c0_68, %c0_69] : memref<3x1x32xf32, #tpu.memory_space<vmem>>, vector<1x1x32xf32>
      %98 = vector.shape_cast %97 : vector<1x1x32xf32> to vector<1x32xf32>
      %c0_70 = arith.constant 0 : index
      %c0_71 = arith.constant 0 : index
      %99 = vector.load %arg13[%c0_70, %c0_71] : memref<16x256xbf16, #tpu.memory_space<vmem>>, vector<16x256xbf16>
      %c0_72 = arith.constant 0 : index
      %c0_73 = arith.constant 0 : index
      %100 = vector.load %arg1[%c0_72, %c0_73] : memref<16x16xbf16, #tpu.memory_space<vmem>>, vector<16x16xbf16>
      %cst_74 = arith.constant dense<0.000000e+00> : vector<16x256xf32>
      %101 = tpu.matmul %100, %99, %cst_74 {dimension_numbers = #tpu.dot_dimension_numbers<[1], [0], [0], [1], [0, 0, 1, 1], [], []>} : vector<16x16xbf16>, vector<16x256xbf16>, vector<16x256xf32> -> vector<16x256xf32>
      %cst_75 = arith.constant 1.000000e+00 : f32
      %102 = arith.addf %cst_75, %92 : f32
      %103 = arith.extf %99 : vector<16x256xbf16> to vector<16x256xf32>
      %104 = vector.broadcast %102 : f32 to vector<16x256xf32>
      %105 = arith.mulf %104, %103 : vector<16x256xf32>
      %106 = arith.addf %101, %105 : vector<16x256xf32>
      %107 = arith.truncf %106 : vector<16x256xf32> to vector<16x256xbf16>
      %c1_i32_76 = arith.constant 1 : i32
      %108 = arith.subi %arg15, %c1_i32_76 : i32
      %109 = arith.index_cast %108 : i32 to index
      %c0_77 = arith.constant 0 : index
      %c0_78 = arith.constant 0 : index
      %110 = vector.load %arg3[%109, %c0_77, %c0_78] : memref<2x256x256xbf16, #tpu.memory_space<vmem>>, vector<1x256x256xbf16>
      %111 = vector.shape_cast %110 : vector<1x256x256xbf16> to vector<256x256xbf16>
      %cst_79 = arith.constant dense<0.000000e+00> : vector<16x256xf32>
      %112 = tpu.matmul %107, %111, %cst_79 {dimension_numbers = #tpu.dot_dimension_numbers<[1], [0], [0], [1], [0, 0, 1, 1], [], []>} : vector<16x256xbf16>, vector<256x256xbf16>, vector<16x256xf32> -> vector<16x256xf32>
      %cst_80 = arith.constant dense<0.000000e+00> : vector<256xf32>
      %113 = vector.multi_reduction <add>, %112, %cst_80 [0] : vector<16x256xf32> to vector<256xf32>
      %114 = vector.shape_cast %113 : vector<256xf32> to vector<1x256xf32>
      %115 = arith.mulf %112, %112 : vector<16x256xf32>
      %cst_81 = arith.constant dense<0.000000e+00> : vector<256xf32>
      %116 = vector.multi_reduction <add>, %115, %cst_81 [0] : vector<16x256xf32> to vector<256xf32>
      %117 = vector.shape_cast %116 : vector<256xf32> to vector<1x256xf32>
      %cst_82 = arith.constant dense<0.000000e+00> : vector<1x32xf32>
      %118 = tpu.matmul %114, %0, %cst_82 {dimension_numbers = #tpu.dot_dimension_numbers<[1], [0], [0], [1], [0, 0, 1, 1], [], []>} : vector<1x256xf32>, vector<256x32xf32>, vector<1x32xf32> -> vector<1x32xf32>
      %cst_83 = arith.constant dense<0.000000e+00> : vector<1x32xf32>
      %119 = tpu.matmul %117, %0, %cst_83 {dimension_numbers = #tpu.dot_dimension_numbers<[1], [0], [0], [1], [0, 0, 1, 1], [], []>} : vector<1x256xf32>, vector<256x32xf32>, vector<1x32xf32> -> vector<1x32xf32>
      %120 = vector.broadcast %cst_41 : f32 to vector<1x32xf32>
      %121 = arith.divf %118, %120 : vector<1x32xf32>
      %122 = vector.broadcast %cst_41 : f32 to vector<1x32xf32>
      %123 = arith.divf %119, %122 : vector<1x32xf32>
      %124 = arith.mulf %121, %121 : vector<1x32xf32>
      %125 = arith.subf %123, %124 : vector<1x32xf32>
      %cst_84 = arith.constant 0.000000e+00 : f32
      %126 = vector.broadcast %cst_84 : f32 to vector<1x32xf32>
      %127 = arith.maximumf %125, %126 : vector<1x32xf32>
      %cst_85 = arith.constant 9.99999974E-6 : f32
      %128 = vector.broadcast %cst_85 : f32 to vector<1x32xf32>
      %129 = arith.addf %127, %128 : vector<1x32xf32>
      %130 = math.rsqrt %129 : vector<1x32xf32>
      %131 = arith.mulf %95, %130 : vector<1x32xf32>
      %132 = arith.mulf %121, %131 : vector<1x32xf32>
      %133 = arith.subf %98, %132 : vector<1x32xf32>
      %cst_86 = arith.constant dense<0.000000e+00> : vector<1x256xf32>
      %134 = tpu.matmul %131, %1, %cst_86 {dimension_numbers = #tpu.dot_dimension_numbers<[1], [0], [0], [1], [0, 0, 1, 1], [], []>} : vector<1x32xf32>, vector<32x256xf32>, vector<1x256xf32> -> vector<1x256xf32>
      %cst_87 = arith.constant dense<0.000000e+00> : vector<1x256xf32>
      %135 = tpu.matmul %133, %1, %cst_87 {dimension_numbers = #tpu.dot_dimension_numbers<[1], [0], [0], [1], [0, 0, 1, 1], [], []>} : vector<1x32xf32>, vector<32x256xf32>, vector<1x256xf32> -> vector<1x256xf32>
      %136 = vector.broadcast %134 : vector<1x256xf32> to vector<16x256xf32>
      %137 = arith.mulf %112, %136 : vector<16x256xf32>
      %138 = vector.broadcast %135 : vector<1x256xf32> to vector<16x256xf32>
      %139 = arith.addf %137, %138 : vector<16x256xf32>
      %cst_88 = arith.constant 0.000000e+00 : f32
      %140 = vector.broadcast %cst_88 : f32 to vector<16x256xf32>
      %141 = arith.maximumf %139, %140 : vector<16x256xf32>
      %142 = arith.truncf %141 : vector<16x256xf32> to vector<16x256xbf16>
      %c0_89 = arith.constant 0 : index
      %c0_90 = arith.constant 0 : index
      %143 = vector.load %arg13[%c0_89, %c0_90] : memref<16x256xbf16, #tpu.memory_space<vmem>>, vector<16x256xbf16>
      tpu.vector_store %arg13[%c0_89, %c0_90], %142 {strides = array<i32>} : memref<16x256xbf16, #tpu.memory_space<vmem>>, vector<16x256xbf16>,
      %144 = arith.index_cast %arg15 : i32 to index
      %c0_91 = arith.constant 0 : index
      %c0_92 = arith.constant 0 : index
      %145 = vector.load %arg4[%144, %c0_91, %c0_92] : memref<3x256x256xbf16, #tpu.memory_space<vmem>>, vector<1x256x256xbf16>
      %146 = vector.shape_cast %145 : vector<1x256x256xbf16> to vector<256x256xbf16>
      %cst_93 = arith.constant dense<0.000000e+00> : vector<16x256xf32>
      %147 = tpu.matmul %142, %146, %cst_93 {dimension_numbers = #tpu.dot_dimension_numbers<[1], [0], [0], [1], [0, 0, 1, 1], [], []>} : vector<16x256xbf16>, vector<256x256xbf16>, vector<16x256xf32> -> vector<16x256xf32>
      %148 = arith.addf %90, %147 : vector<16x256xf32>
      %c0_94 = arith.constant 0 : index
      %c0_95 = arith.constant 0 : index
      %149 = vector.load %arg14[%c0_94, %c0_95] : memref<16x256xf32, #tpu.memory_space<vmem>>, vector<16x256xf32>
      tpu.vector_store %arg14[%c0_94, %c0_95], %148 {strides = array<i32>} : memref<16x256xf32, #tpu.memory_space<vmem>>, vector<16x256xf32>,
    }
    %c2_i32_43 = arith.constant 2 : i32
    %c0_44 = arith.constant 0 : index
    %c0_45 = arith.constant 0 : index
    %56 = vector.load %arg14[%c0_44, %c0_45] : memref<16x256xf32, #tpu.memory_space<vmem>>, vector<16x256xf32>
    %c0_46 = arith.constant 0 : index
    %c0_47 = arith.constant 0 : index
    %57 = vector.load %arg8[%c0_46, %c0_47] : memref<1x32xf32, #tpu.memory_space<vmem>>, vector<1x32xf32>
    %c0_48 = arith.constant 0 : index
    %c0_49 = arith.constant 0 : index
    %58 = vector.load %arg9[%c0_48, %c0_49] : memref<1x32xf32, #tpu.memory_space<vmem>>, vector<1x32xf32>
    %cst_50 = arith.constant dense<0.000000e+00> : vector<256xf32>
    %59 = vector.multi_reduction <add>, %56, %cst_50 [0] : vector<16x256xf32> to vector<256xf32>
    %60 = vector.shape_cast %59 : vector<256xf32> to vector<1x256xf32>
    %61 = arith.mulf %56, %56 : vector<16x256xf32>
    %cst_51 = arith.constant dense<0.000000e+00> : vector<256xf32>
    %62 = vector.multi_reduction <add>, %61, %cst_51 [0] : vector<16x256xf32> to vector<256xf32>
    %63 = vector.shape_cast %62 : vector<256xf32> to vector<1x256xf32>
    %cst_52 = arith.constant dense<0.000000e+00> : vector<1x32xf32>
    %64 = tpu.matmul %60, %0, %cst_52 {dimension_numbers = #tpu.dot_dimension_numbers<[1], [0], [0], [1], [0, 0, 1, 1], [], []>} : vector<1x256xf32>, vector<256x32xf32>, vector<1x32xf32> -> vector<1x32xf32>
    %cst_53 = arith.constant dense<0.000000e+00> : vector<1x32xf32>
    %65 = tpu.matmul %63, %0, %cst_53 {dimension_numbers = #tpu.dot_dimension_numbers<[1], [0], [0], [1], [0, 0, 1, 1], [], []>} : vector<1x256xf32>, vector<256x32xf32>, vector<1x32xf32> -> vector<1x32xf32>
    %cst_54 = arith.constant 1.280000e+02 : f32
    %66 = vector.broadcast %cst_54 : f32 to vector<1x32xf32>
    %67 = arith.divf %64, %66 : vector<1x32xf32>
    %cst_55 = arith.constant 1.280000e+02 : f32
    %68 = vector.broadcast %cst_55 : f32 to vector<1x32xf32>
    %69 = arith.divf %65, %68 : vector<1x32xf32>
    %70 = arith.mulf %67, %67 : vector<1x32xf32>
    %71 = arith.subf %69, %70 : vector<1x32xf32>
    %cst_56 = arith.constant 0.000000e+00 : f32
    %72 = vector.broadcast %cst_56 : f32 to vector<1x32xf32>
    %73 = arith.maximumf %71, %72 : vector<1x32xf32>
    %cst_57 = arith.constant 9.99999974E-6 : f32
    %74 = vector.broadcast %cst_57 : f32 to vector<1x32xf32>
    %75 = arith.addf %73, %74 : vector<1x32xf32>
    %76 = math.rsqrt %75 : vector<1x32xf32>
    %77 = arith.mulf %57, %76 : vector<1x32xf32>
    %78 = arith.mulf %67, %77 : vector<1x32xf32>
    %79 = arith.subf %58, %78 : vector<1x32xf32>
    %cst_58 = arith.constant dense<0.000000e+00> : vector<1x256xf32>
    %80 = tpu.matmul %77, %1, %cst_58 {dimension_numbers = #tpu.dot_dimension_numbers<[1], [0], [0], [1], [0, 0, 1, 1], [], []>} : vector<1x32xf32>, vector<32x256xf32>, vector<1x256xf32> -> vector<1x256xf32>
    %cst_59 = arith.constant dense<0.000000e+00> : vector<1x256xf32>
    %81 = tpu.matmul %79, %1, %cst_59 {dimension_numbers = #tpu.dot_dimension_numbers<[1], [0], [0], [1], [0, 0, 1, 1], [], []>} : vector<1x32xf32>, vector<32x256xf32>, vector<1x256xf32> -> vector<1x256xf32>
    %82 = vector.broadcast %80 : vector<1x256xf32> to vector<16x256xf32>
    %83 = arith.mulf %56, %82 : vector<16x256xf32>
    %84 = vector.broadcast %81 : vector<1x256xf32> to vector<16x256xf32>
    %85 = arith.addf %83, %84 : vector<16x256xf32>
    %cst_60 = arith.constant dense<0.000000e+00> : vector<16x32xf32>
    %86 = tpu.matmul %85, %0, %cst_60 {dimension_numbers = #tpu.dot_dimension_numbers<[1], [0], [0], [1], [0, 0, 1, 1], [], []>} : vector<16x256xf32>, vector<256x32xf32>, vector<16x32xf32> -> vector<16x32xf32>
    %cst_61 = arith.constant 1.250000e-01 : f32
    %87 = vector.broadcast %cst_61 : f32 to vector<16x32xf32>
    %88 = arith.mulf %86, %87 : vector<16x32xf32>
    %c0_62 = arith.constant 0 : index
    %c0_63 = arith.constant 0 : index
    %89 = vector.load %arg12[%c0_62, %c0_63] : memref<16x32xf32, #tpu.memory_space<vmem>>, vector<16x32xf32>
    tpu.vector_store %arg12[%c0_62, %c0_63], %88 {strides = array<i32>} : memref<16x32xf32, #tpu.memory_space<vmem>>, vector<16x32xf32>,
    return
  }
}

</mosaic_0001>

<llo_original>
// kernel: tpu_custom_call.1
$region0: #{tpu_custom_call.1}
  #allocation0 [shape = 'u32[]', space=smem, size = 0x4, offset = 0x4, fixed_abs, tag = 'smem constant byte address 0x4 - core index']
  #allocation1 [shape = 'u32[144,128]{1,0:T(1,128)}', space=vmem, size = 0x12000, scoped, tag = 'internal scratch']
  #allocation2 [shape = 'bf16[16,256]{1,0:T(8,128)(2,1)}', space=vmem, size = 0x2000, scoped, tag = 'scratch operand']
  #allocation3 [shape = 'f32[16,256]{1,0:T(8,128)}', space=vmem, size = 0x4000, scoped, tag = 'scratch operand']
  %s0 = inlined_call_operand.vmem [shape: f32[16,8], index: 0, kind: input, shape index: {}]
  %s1 = inlined_call_operand.vmem [shape: bf16[16,16], index: 1, kind: input, shape index: {}]
  %s2 = inlined_call_operand.vmem [shape: f32[8,256], index: 2, kind: input, shape index: {}]
  %s3 = inlined_call_operand.hbm [shape: bf16[2,256,256], index: 3, kind: input, shape index: {}]
  %s4 = inlined_call_operand.hbm [shape: bf16[3,256,256], index: 4, kind: input, shape index: {}]
  %s5 = inlined_call_operand.vmem [shape: f32[3], index: 5, kind: input, shape index: {}]
  %s6 = inlined_call_operand.vmem [shape: f32[3,1,32], index: 6, kind: input, shape index: {}]
  %s7 = inlined_call_operand.vmem [shape: f32[3,1,32], index: 7, kind: input, shape index: {}]
  %s8 = inlined_call_operand.vmem [shape: f32[1,32], index: 8, kind: input, shape index: {}]
  %s9 = inlined_call_operand.vmem [shape: f32[1,32], index: 9, kind: input, shape index: {}]
  %s10 = inlined_call_operand.vmem [shape: f32[256,32], index: 10, kind: input, shape index: {}]
  %s11 = inlined_call_operand.vmem [shape: f32[32,256], index: 11, kind: input, shape index: {}]
  %s12 = inlined_call_operand.hbm [shape: f32[16,32], index: 12, kind: output, shape index: {}]
  %s13 = sld [smem:[#allocation0]]
  $region77: #{tpu_custom_call.1} parent=0
    _
  %s15 = ssub.s32 1, %s13
  %s16 = scalar_select 0, %s15, %s13
  $region1: #{tpu_custom_call.1} parent=0
    #allocation4 [shape = 'u8[262144]{0}', space=vmem, size = 0x40000, scoped, tag = 'input window, operand 3, single buffered']
    #allocation5 [shape = 's32[1]{0}', space=sflag, size = 0x4, scoped, tag = 'scoped memory for tpu_custom_call.1']
    #allocation6 [shape = 's32[1]{0}', space=sflag, size = 0x4, scoped, tag = 'scoped memory for tpu_custom_call.1']
    #allocation7 [shape = 's32[1]{0}', space=sflag, size = 0x4, scoped, tag = 'scoped memory for tpu_custom_call.1']
    #allocation8 [shape = 'u8[393216]{0}', space=vmem, size = 0x60000, scoped, tag = 'input window, operand 4, single buffered']
    #allocation9 [shape = 's32[1]{0}', space=sflag, size = 0x4, scoped, tag = 'scoped memory for tpu_custom_call.1']
    #allocation10 [shape = 'u8[512]{0}', space=smem, size = 0x200, scoped, tag = 'input window, operand 5, single buffered']
    #allocation11 [shape = 'u8[8192]{0}', space=vmem, size = 0x2000, scoped, tag = 'output window, operand 0, single buffered']
    %17 = vsyncpa [#allocation5], 0
    %18 = vsyncpa [#allocation9], 0
    %19 = vsyncpa [#allocation7], 0
    %20 = vsyncpa [#allocation6], 0
    // Predicated region
    $region2: #{tpu_custom_call.1} parent=1 // pred_check
      _
    $region3: #{tpu_custom_call.1} parent=1 // pred_check_branch
      %22 = sbr.rel (0) target = $region5
    $region4: #{tpu_custom_call.1} parent=1 // pred_region
      _
    $region5: #{tpu_custom_call.1} parent=1 // pred_fallthru
      _
    // Predicated region
    $region6: #{tpu_custom_call.1} parent=1 // pred_check
      _
    $region7: #{tpu_custom_call.1} parent=1 // pred_check_branch
      %24 = sbr.rel (0) target = $region9
    $region8: #{tpu_custom_call.1} parent=1 // pred_region
      _
    $region9: #{tpu_custom_call.1} parent=1 // pred_fallthru
      _
    // Predicated region
    $region10: #{tpu_custom_call.1} parent=1 // pred_check
      _
    $region11: #{tpu_custom_call.1} parent=1 // pred_check_branch
      %26 = sbr.rel (0) target = $region13
    $region12: #{tpu_custom_call.1} parent=1 // pred_region
      _
    $region13: #{tpu_custom_call.1} parent=1 // pred_fallthru
      _
    // Predicated region
    $region14: #{tpu_custom_call.1} parent=1 // pred_check
      _
    $region15: #{tpu_custom_call.1} parent=1 // pred_check_branch
      %28 = sbr.rel (0) target = $region17
    $region16: #{tpu_custom_call.1} parent=1 // pred_region
      %s30 = ssub.s32 8192, 8192
      %31 = vsyncadd [#allocation5], %s30
      %s32 = sshll.u32 [#allocation4], 4
      %s33 = int_to_ptr.vmem [resolvable:$true] %s32
      %38 = dma.hbm_to_vmem [thread:$0]  %s3, 8192, %s33, [#allocation5], 128, 128, 8
    $region17: #{tpu_custom_call.1} parent=1 // pred_fallthru
      _
    // Predicated region
    $region18: #{tpu_custom_call.1} parent=1 // pred_check
      _
    $region19: #{tpu_custom_call.1} parent=1 // pred_check_branch
      %40 = sbr.rel (0) target = $region21
    $region20: #{tpu_custom_call.1} parent=1 // pred_region
      %s42 = ssub.s32 12288, 12288
      %43 = vsyncadd [#allocation9], %s42
      %s44 = sshll.u32 [#allocation8], 4
      %s45 = int_to_ptr.vmem [resolvable:$true] %s44
      %50 = dma.hbm_to_vmem [thread:$0]  %s4, 12288, %s45, [#allocation9], 128, 128, 8
    $region21: #{tpu_custom_call.1} parent=1 // pred_fallthru
      _
    // Predicated region
    $region22: #{tpu_custom_call.1} parent=1 // pred_check
      _
    $region23: #{tpu_custom_call.1} parent=1 // pred_check_branch
      %52 = sbr.rel (0) target = $region25
    $region24: #{tpu_custom_call.1} parent=1 // pred_region
      %s54 = ssub.s32 16, 16
      %55 = vsyncadd [#allocation7], %s54
      %s57 = sshll.u32 %s5, 4
      %s58 = int_to_ptr.vmem [resolvable:$true] %s57
      %60 = dma.vmem_to_smem %s58, 16, [#allocation10], [#allocation7]
    $region25: #{tpu_custom_call.1} parent=1 // pred_fallthru
      _
    // Predicated region
    $region26: #{tpu_custom_call.1} parent=1 // pred_check
      _
    $region27: #{tpu_custom_call.1} parent=1 // pred_check_branch
      %62 = sbr.rel (0) target = $region29
    $region28: #{tpu_custom_call.1} parent=1 // pred_region
      _
    $region29: #{tpu_custom_call.1} parent=1 // pred_fallthru
      _
    // Predicated region
    $region30: #{tpu_custom_call.1} parent=1 // pred_check
      _
    $region31: #{tpu_custom_call.1} parent=1 // pred_check_branch
      %64 = sbr.rel (0) target = $region33
    $region32: #{tpu_custom_call.1} parent=1 // pred_region
      _
    $region33: #{tpu_custom_call.1} parent=1 // pred_fallthru
      _
    // Predicated region
    $region34: #{tpu_custom_call.1} parent=1 // pred_check
      _
    $region35: #{tpu_custom_call.1} parent=1 // pred_check_branch
      %66 = sbr.rel (0) target = $region37
    $region36: #{tpu_custom_call.1} parent=1 // pred_region
      _
    $region37: #{tpu_custom_call.1} parent=1 // pred_fallthru
      _
    // Predicated region
    $region38: #{tpu_custom_call.1} parent=1 // pred_check
      _
    $region39: #{tpu_custom_call.1} parent=1 // pred_check_branch
      %68 = sbr.rel (0) target = $region41
    $region40: #{tpu_custom_call.1} parent=1 // pred_region
      _
    $region41: #{tpu_custom_call.1} parent=1 // pred_fallthru
      _
    // Predicated region
    $region42: #{tpu_custom_call.1} parent=1 // pred_check
      _
    $region43: #{tpu_custom_call.1} parent=1 // pred_check_branch
      %70 = sbr.rel (0) target = $region45
    $region44: #{tpu_custom_call.1} parent=1 // pred_region
      _
    $region45: #{tpu_custom_call.1} parent=1 // pred_fallthru
      _
    // Predicated region
    $region46: #{tpu_custom_call.1} parent=1 // pred_check
      _
    $region47: #{tpu_custom_call.1} parent=1 // pred_check_branch
      %72 = sbr.rel (0) target = $region49
    $region48: #{tpu_custom_call.1} parent=1 // pred_region
      _
    $region49: #{tpu_custom_call.1} parent=1 // pred_fallthru
      _
    // Predicated region
    $region50: #{tpu_custom_call.1} parent=1 // pred_check
      _
    $region51: #{tpu_custom_call.1} parent=1 // pred_check_branch
      %74 = sbr.rel (0) target = $region53
    $region52: #{tpu_custom_call.1} parent=1 // pred_region
      %75 = dma.done [#allocation5], 8192
    $region53: #{tpu_custom_call.1} parent=1 // pred_fallthru
      _
    // Predicated region
    $region54: #{tpu_custom_call.1} parent=1 // pred_check
      _
    $region55: #{tpu_custom_call.1} parent=1 // pred_check_branch
      %77 = sbr.rel (0) target = $region57
    $region56: #{tpu_custom_call.1} parent=1 // pred_region
      %78 = dma.done [#allocation9], 12288
    $region57: #{tpu_custom_call.1} parent=1 // pred_fallthru
      _
    // Predicated region
    $region58: #{tpu_custom_call.1} parent=1 // pred_check
      _
    $region59: #{tpu_custom_call.1} parent=1 // pred_check_branch
      %80 = sbr.rel (0) target = $region61
    $region60: #{tpu_custom_call.1} parent=1 // pred_region
      %81 = dma.done [#allocation7], 16
    $region61: #{tpu_custom_call.1} parent=1 // pred_fallthru
      _
    %82 = sfence
    %v84 = vld [vmem:[%s10] sm:$0xff]
    %v85 = vld [vmem:[%s10 + $0x8] sm:$0xff]
    %v86 = vld [vmem:[%s10 + $0x10] sm:$0xff]
    %v87 = vld [vmem:[%s10 + $0x18] sm:$0xff]
    %v88 = vld [vmem:[%s10 + $0x20] sm:$0xff]
    %v89 = vld [vmem:[%s10 + $0x28] sm:$0xff]
    %v90 = vld [vmem:[%s10 + $0x30] sm:$0xff]
    %v91 = vld [vmem:[%s10 + $0x38] sm:$0xff]
    %v92 = vld [vmem:[%s10 + $0x40] sm:$0xff]
    %v93 = vld [vmem:[%s10 + $0x48] sm:$0xff]
    %v94 = vld [vmem:[%s10 + $0x50] sm:$0xff]
    %v95 = vld [vmem:[%s10 + $0x58] sm:$0xff]
    %v96 = vld [vmem:[%s10 + $0x60] sm:$0xff]
    %v97 = vld [vmem:[%s10 + $0x68] sm:$0xff]
    %v98 = vld [vmem:[%s10 + $0x70] sm:$0xff]
    %v99 = vld [vmem:[%s10 + $0x78] sm:$0xff]
    %v100 = vld [vmem:[%s10 + $0x80] sm:$0xff]
    %v101 = vld [vmem:[%s10 + $0x88] sm:$0xff]
    %v102 = vld [vmem:[%s10 + $0x90] sm:$0xff]
    %v103 = vld [vmem:[%s10 + $0x98] sm:$0xff]
    %v104 = vld [vmem:[%s10 + $0xa0] sm:$0xff]
    %v105 = vld [vmem:[%s10 + $0xa8] sm:$0xff]
    %v106 = vld [vmem:[%s10 + $0xb0] sm:$0xff]
    %v107 = vld [vmem:[%s10 + $0xb8] sm:$0xff]
    %v108 = vld [vmem:[%s10 + $0xc0] sm:$0xff]
    %v109 = vld [vmem:[%s10 + $0xc8] sm:$0xff]
    %v110 = vld [vmem:[%s10 + $0xd0] sm:$0xff]
    %v111 = vld [vmem:[%s10 + $0xd8] sm:$0xff]
    %v112 = vld [vmem:[%s10 + $0xe0] sm:$0xff]
    %v113 = vld [vmem:[%s10 + $0xe8] sm:$0xff]
    %v114 = vld [vmem:[%s10 + $0xf0] sm:$0xff]
    %v115 = vld [vmem:[%s10 + $0xf8] sm:$0xff]
    %v116 = vld [vmem:[%s11] sm:$0xff]
    %v117 = vld [vmem:[%s11 + $0x8] sm:$0xff]
    %v118 = vld [vmem:[%s11 + $0x10] sm:$0xff]
    %v119 = vld [vmem:[%s11 + $0x18] sm:$0xff]
    %v120 = vld [vmem:[%s11 + $0x20] sm:$0xff]
    %v121 = vld [vmem:[%s11 + $0x28] sm:$0xff]
    %v122 = vld [vmem:[%s11 + $0x30] sm:$0xff]
    %v123 = vld [vmem:[%s11 + $0x38] sm:$0xff]
    %v124 = vld [vmem:[%s0] sm:$0xff]
    %v125 = vld [vmem:[%s0 + $0x8] sm:$0xff]
    %v126 = vld [vmem:[%s2] sm:$0xff]
    %v127 = vld [vmem:[%s2 + $0x8] sm:$0xff]
    %vm128 = vcmask 64512
    %v130 = vsel %vm128, %v124, 0
    %v133 = vsel %vm128, %v125, 0
    %135 = vmatprep.subr.mxu0 0.0
    %136 = vmatpush1.msra.mxu0 0.0
    %137 = vmatprep.subr.mxu0 0.0
    %138 = vmatpush1.msra.mxu0 0.0
    %139 = vmatprep.subr.mxu0 0.0
    %140 = vmatpush1.msra.mxu0 0.0
    %141 = vmatprep.subr.mxu0 0.0
    %142 = vmatpush1.msra.mxu0 0.0
    %143 = vmatprep.subr.mxu0 0.0
    %144 = vmatpush1.msra.mxu0 0.0
    %145 = vmatprep.subr.mxu0 0.0
    %146 = vmatpush1.msra.mxu0 0.0
    %147 = vmatprep.subr.mxu0 0.0
    %148 = vmatpush1.msra.mxu0 0.0
    %149 = vmatprep.subr.mxu0 0.0
    %150 = vmatpush1.msra.mxu0 0.0
    %151 = vmatprep.subr.mxu0 0.0
    %152 = vmatpush1.msra.mxu0 0.0
    %153 = vmatprep.subr.mxu0 0.0
    %154 = vmatpush1.msra.mxu0 0.0
    %155 = vmatprep.subr.mxu0 0.0
    %156 = vmatpush1.msra.mxu0 0.0
    %157 = vmatprep.subr.mxu0 0.0
    %158 = vmatpush1.msra.mxu0 0.0
    %159 = vmatprep.subr.mxu0 0.0
    %160 = vmatpush1.msra.mxu0 0.0
    %161 = vmatprep.subr.mxu0 0.0
    %162 = vmatpush1.msra.mxu0 0.0
    %163 = vmatprep.subr.mxu0 0.0
    %164 = vmatpush1.msra.mxu0 0.0
    %165 = vmatprep.subr.mxu0 %v127
    %166 = vmatpush1.msra.mxu0 %v126
    %167 = vmatprep.subr.mxu0 0.0
    %168 = vmatpush2.msra.mxu0 0.0
    %169 = vmatprep.subr.mxu0 0.0
    %170 = vmatpush2.msra.mxu0 0.0
    %171 = vmatprep.subr.mxu0 0.0
    %172 = vmatpush2.msra.mxu0 0.0
    %173 = vmatprep.subr.mxu0 0.0
    %174 = vmatpush2.msra.mxu0 0.0
    %175 = vmatprep.subr.mxu0 0.0
    %176 = vmatpush2.msra.mxu0 0.0
    %177 = vmatprep.subr.mxu0 0.0
    %178 = vmatpush2.msra.mxu0 0.0
    %179 = vmatprep.subr.mxu0 0.0
    %180 = vmatpush2.msra.mxu0 0.0
    %181 = vmatprep.subr.mxu0 0.0
    %182 = vmatpush2.msra.mxu0 0.0
    %183 = vmatprep.subr.mxu0 0.0
    %184 = vmatpush2.msra.mxu0 0.0
    %185 = vmatprep.subr.mxu0 0.0
    %186 = vmatpush2.msra.mxu0 0.0
    %187 = vmatprep.subr.mxu0 0.0
    %188 = vmatpush2.msra.mxu0 0.0
    %189 = vmatprep.subr.mxu0 0.0
    %190 = vmatpush2.msra.mxu0 0.0
    %191 = vmatprep.subr.mxu0 0.0
    %192 = vmatpush2.msra.mxu0 0.0
    %193 = vmatprep.subr.mxu0 0.0
    %194 = vmatpush2.msra.mxu0 0.0
    %195 = vmatprep.subr.mxu0 0.0
    %196 = vmatpush2.msra.mxu0 0.0
    %197 = vmatprep.subr.mxu0 0.0
    %198 = vmatpush2.msra.mxu0 0.0
    %199 = vmatprep.mubr.f32.mxu0 0.0
    %200 = vmatmul.mubr.f32.gmra.mxu0 %v130
    %v201 = vpop.f32.mrf.mxu0
    %v202 = vadd.f32 0.0, %v201
    %v203 = vpop.f32.mrf.mxu0
    %v204 = vadd.f32 0.0, %v203
    %205 = vmatprep.mubr.f32.mxu0 0.0
    %206 = vmatmul.mubr.f32.gmra.mxu0 %v133
    %v207 = vpop.f32.mrf.mxu0
    %v208 = vadd.f32 0.0, %v207
    %v209 = vpop.f32.mrf.mxu0
    %v210 = vadd.f32 0.0, %v209
    %211 = vdwg.mxu0
    %v212 = vpack.c.bf16 %v208, %v202
    %v213 = vpack.c.bf16 %v210, %v204
    %v216 = vunpack.c.l.b16 %v212
    %v217 = vunpack.c.l.b16 %v213
    %v218 = vunpack.c.h.b16 %v212
    %v219 = vunpack.c.h.b16 %v213
    %v220 = vpack.c.b16 %v217, %v216
    %v221 = vpack.c.b16 %v219, %v218
    %224 = vst [vmem:[#allocation2] sm:$0xff] %v220
    %225 = vst [vmem:[#allocation2 + $0x8] sm:$0xff] %v221
    %s226 = sld [smem:[#allocation10]]
    %v227 = vld [vmem:[%s6] sm:$0x1]
    %v228 = vld [vmem:[%s7] sm:$0x1]
    %v229 = vld [vmem:[#allocation2] sm:$0xff]
    %v230 = vld [vmem:[#allocation2 + $0x8] sm:$0xff]
    %v231 = vld [vmem:[%s1] sm:$0xf]
    %v232 = vld [vmem:[%s1 + $0x4] sm:$0xf]
    %s233 = sadd.f32 %s226, 1.0
    %v234 = vunpack.c.l.bf16 %v229
    %v235 = vunpack.c.h.bf16 %v229
    %v236 = vunpack.c.l.bf16 %v230
    %v237 = vunpack.c.h.bf16 %v230
    %v238 = vstv %s233
    %v239 = vmul.f32 %v238, %v234
    %v240 = vmul.f32 %v238, %v235
    %v241 = vmul.f32 %v238, %v236
    %v242 = vmul.f32 %v238, %v237
    %v245 = vunpack.c.l.b16 %v231
    %v246 = vunpack.c.l.b16 %v232
    %v247 = vpack.c.b16 %v246, %v245
    %v250 = vunpack.c.l.b16 %v229
    %v251 = vunpack.c.h.b16 %v229
    %v252 = vunpack.c.l.b16 %v230
    %v253 = vunpack.c.h.b16 %v230
    %v254 = vpack.c.b16 %v252, %v250
    %v255 = vpack.c.b16 %v253, %v251
    %vm258 = vcmask 130048
    %v260 = vsel %vm258, %v247, 0
    %262 = vmatprep.subr.bf16.mxu0 0
    %263 = vmatpush1.bf16.msra.mxu0 0
    %264 = vmatprep.subr.bf16.mxu0 0
    %265 = vmatpush1.bf16.msra.mxu0 0
    %266 = vmatprep.subr.bf16.mxu0 0
    %267 = vmatpush1.bf16.msra.mxu0 0
    %268 = vmatprep.subr.bf16.mxu0 0
    %269 = vmatpush1.bf16.msra.mxu0 0
    %270 = vmatprep.subr.bf16.mxu0 0
    %271 = vmatpush1.bf16.msra.mxu0 0
    %272 = vmatprep.subr.bf16.mxu0 0
    %273 = vmatpush1.bf16.msra.mxu0 0
    %274 = vmatprep.subr.bf16.mxu0 0
    %275 = vmatpush1.bf16.msra.mxu0 0
    %276 = vmatprep.subr.bf16.mxu0 %v255
    %277 = vmatpush1.bf16.msra.mxu0 %v254
    %278 = vmatprep.subr.bf16.mxu0 0
    %279 = vmatpush2.bf16.msra.mxu0 0
    %280 = vmatprep.subr.bf16.mxu0 0
    %281 = vmatpush2.bf16.msra.mxu0 0
    %282 = vmatprep.subr.bf16.mxu0 0
    %283 = vmatpush2.bf16.msra.mxu0 0
    %284 = vmatprep.subr.bf16.mxu0 0
    %285 = vmatpush2.bf16.msra.mxu0 0
    %286 = vmatprep.subr.bf16.mxu0 0
    %287 = vmatpush2.bf16.msra.mxu0 0
    %288 = vmatprep.subr.bf16.mxu0 0
    %289 = vmatpush2.bf16.msra.mxu0 0
    %290 = vmatprep.subr.bf16.mxu0 0
    %291 = vmatpush2.bf16.msra.mxu0 0
    %292 = vmatprep.subr.bf16.mxu0 0
    %293 = vmatpush2.bf16.msra.mxu0 0
    %294 = vmatprep.mubr.bf16.mxu0 0
    %295 = vmatmul.mubr.bf16.gmra.mxu0 %v260
    %v296 = vpop.f32.mrf.mxu0
    %v297 = vadd.f32 %v239, %v296
    %v298 = vpop.f32.mrf.mxu0
    %v299 = vadd.f32 %v240, %v298
    %v300 = vpop.f32.mrf.mxu0
    %v301 = vadd.f32 %v241, %v300
    %v302 = vpop.f32.mrf.mxu0
    %v303 = vadd.f32 %v242, %v302
    %304 = vdwg.mxu0
    %v305 = vadd.f32 %v297, %v301
    %v306 = vrot.slane %v305, 4
    %v307 = vadd.f32 %v305, %v306
    %v308 = vrot.slane %v307, 2
    %v309 = vadd.f32 %v307, %v308
    %v310 = vrot.slane %v309, 1
    %v311 = vadd.f32 %v309, %v310
    %v312 = vadd.f32 %v299, %v303
    %v313 = vrot.slane %v312, 4
    %v314 = vadd.f32 %v312, %v313
    %v315 = vrot.slane %v314, 2
    %v316 = vadd.f32 %v314, %v315
    %v317 = vrot.slane %v316, 1
    %v318 = vadd.f32 %v316, %v317
    %v319 = vmul.f32 %v297, %v297
    %v320 = vmul.f32 %v299, %v299
    %v321 = vmul.f32 %v301, %v301
    %v322 = vmul.f32 %v303, %v303
    %v323 = vadd.f32 %v319, %v321
    %v324 = vrot.slane %v323, 4
    %v325 = vadd.f32 %v323, %v324
    %v326 = vrot.slane %v325, 2
    %v327 = vadd.f32 %v325, %v326
    %v328 = vrot.slane %v327, 1
    %v329 = vadd.f32 %v327, %v328
    %v330 = vadd.f32 %v320, %v322
    %v331 = vrot.slane %v330, 4
    %v332 = vadd.f32 %v330, %v331
    %v333 = vrot.slane %v332, 2
    %v334 = vadd.f32 %v332, %v333
    %v335 = vrot.slane %v334, 1
    %v336 = vadd.f32 %v334, %v335
    %337 = vmatprep.subr.mxu0 0.0
    %338 = vmatpush1.msra.mxu0 %v99
    %339 = vmatprep.subr.mxu0 0.0
    %340 = vmatpush1.msra.mxu0 %v98
    %341 = vmatprep.subr.mxu0 0.0
    %342 = vmatpush1.msra.mxu0 %v97
    %343 = vmatprep.subr.mxu0 0.0
    %344 = vmatpush1.msra.mxu0 %v96
    %345 = vmatprep.subr.mxu0 0.0
    %346 = vmatpush1.msra.mxu0 %v95
    %347 = vmatprep.subr.mxu0 0.0
    %348 = vmatpush1.msra.mxu0 %v94
    %349 = vmatprep.subr.mxu0 0.0
    %350 = vmatpush1.msra.mxu0 %v93
    %351 = vmatprep.subr.mxu0 0.0
    %352 = vmatpush1.msra.mxu0 %v92
    %353 = vmatprep.subr.mxu0 0.0
    %354 = vmatpush1.msra.mxu0 %v91
    %355 = vmatprep.subr.mxu0 0.0
    %356 = vmatpush1.msra.mxu0 %v90
    %357 = vmatprep.subr.mxu0 0.0
    %358 = vmatpush1.msra.mxu0 %v89
    %359 = vmatprep.subr.mxu0 0.0
    %360 = vmatpush1.msra.mxu0 %v88
    %361 = vmatprep.subr.mxu0 0.0
    %362 = vmatpush1.msra.mxu0 %v87
    %363 = vmatprep.subr.mxu0 0.0
    %364 = vmatpush1.msra.mxu0 %v86
    %365 = vmatprep.subr.mxu0 0.0
    %366 = vmatpush1.msra.mxu0 %v85
    %367 = vmatprep.subr.mxu0 0.0
    %368 = vmatpush1.msra.mxu0 %v84
    %369 = vmatprep.subr.mxu0 0.0
    %370 = vmatpush2.msra.mxu0 %v115
    %371 = vmatprep.subr.mxu0 0.0
    %372 = vmatpush2.msra.mxu0 %v114
    %373 = vmatprep.subr.mxu0 0.0
    %374 = vmatpush2.msra.mxu0 %v113
    %375 = vmatprep.subr.mxu0 0.0
    %376 = vmatpush2.msra.mxu0 %v112
    %377 = vmatprep.subr.mxu0 0.0
    %378 = vmatpush2.msra.mxu0 %v111
    %379 = vmatprep.subr.mxu0 0.0
    %380 = vmatpush2.msra.mxu0 %v110
    %381 = vmatprep.subr.mxu0 0.0
    %382 = vmatpush2.msra.mxu0 %v109
    %383 = vmatprep.subr.mxu0 0.0
    %384 = vmatpush2.msra.mxu0 %v108
    %385 = vmatprep.subr.mxu0 0.0
    %386 = vmatpush2.msra.mxu0 %v107
    %387 = vmatprep.subr.mxu0 0.0
    %388 = vmatpush2.msra.mxu0 %v106
    %389 = vmatprep.subr.mxu0 0.0
    %390 = vmatpush2.msra.mxu0 %v105
    %391 = vmatprep.subr.mxu0 0.0
    %392 = vmatpush2.msra.mxu0 %v104
    %393 = vmatprep.subr.mxu0 0.0
    %394 = vmatpush2.msra.mxu0 %v103
    %395 = vmatprep.subr.mxu0 0.0
    %396 = vmatpush2.msra.mxu0 %v102
    %397 = vmatprep.subr.mxu0 0.0
    %398 = vmatpush2.msra.mxu0 %v101
    %399 = vmatprep.subr.mxu0 0.0
    %400 = vmatpush2.msra.mxu0 %v100
    %401 = vmatprep.mubr.f32.mxu0 %v318
    %402 = vmatmul.mubr.f32.gmra.mxu0 %v311
    %v403 = vpop.f32.mrf.mxu0
    %v404 = vadd.f32 0.0, %v403
    %v405 = vpop.f32.mrf.mxu0
    %406 = vdwg.mxu0
    %407 = vmatprep.subr.mxu0 0.0
    %408 = vmatpush1.msra.mxu0 %v99
    %409 = vmatprep.subr.mxu0 0.0
    %410 = vmatpush1.msra.mxu0 %v98
    %411 = vmatprep.subr.mxu0 0.0
    %412 = vmatpush1.msra.mxu0 %v97
    %413 = vmatprep.subr.mxu0 0.0
    %414 = vmatpush1.msra.mxu0 %v96
    %415 = vmatprep.subr.mxu0 0.0
    %416 = vmatpush1.msra.mxu0 %v95
    %417 = vmatprep.subr.mxu0 0.0
    %418 = vmatpush1.msra.mxu0 %v94
    %419 = vmatprep.subr.mxu0 0.0
    %420 = vmatpush1.msra.mxu0 %v93
    %421 = vmatprep.subr.mxu0 0.0
    %422 = vmatpush1.msra.mxu0 %v92
    %423 = vmatprep.subr.mxu0 0.0
    %424 = vmatpush1.msra.mxu0 %v91
    %425 = vmatprep.subr.mxu0 0.0
    %426 = vmatpush1.msra.mxu0 %v90
    %427 = vmatprep.subr.mxu0 0.0
    %428 = vmatpush1.msra.mxu0 %v89
    %429 = vmatprep.subr.mxu0 0.0
    %430 = vmatpush1.msra.mxu0 %v88
    %431 = vmatprep.subr.mxu0 0.0
    %432 = vmatpush1.msra.mxu0 %v87
    %433 = vmatprep.subr.mxu0 0.0
    %434 = vmatpush1.msra.mxu0 %v86
    %435 = vmatprep.subr.mxu0 0.0
    %436 = vmatpush1.msra.mxu0 %v85
    %437 = vmatprep.subr.mxu0 0.0
    %438 = vmatpush1.msra.mxu0 %v84
    %439 = vmatprep.subr.mxu0 0.0
    %440 = vmatpush2.msra.mxu0 %v115
    %441 = vmatprep.subr.mxu0 0.0
    %442 = vmatpush2.msra.mxu0 %v114
    %443 = vmatprep.subr.mxu0 0.0
    %444 = vmatpush2.msra.mxu0 %v113
    %445 = vmatprep.subr.mxu0 0.0
    %446 = vmatpush2.msra.mxu0 %v112
    %447 = vmatprep.subr.mxu0 0.0
    %448 = vmatpush2.msra.mxu0 %v111
    %449 = vmatprep.subr.mxu0 0.0
    %450 = vmatpush2.msra.mxu0 %v110
    %451 = vmatprep.subr.mxu0 0.0
    %452 = vmatpush2.msra.mxu0 %v109
    %453 = vmatprep.subr.mxu0 0.0
    %454 = vmatpush2.msra.mxu0 %v108
    %455 = vmatprep.subr.mxu0 0.0
    %456 = vmatpush2.msra.mxu0 %v107
    %457 = vmatprep.subr.mxu0 0.0
    %458 = vmatpush2.msra.mxu0 %v106
    %459 = vmatprep.subr.mxu0 0.0
    %460 = vmatpush2.msra.mxu0 %v105
    %461 = vmatprep.subr.mxu0 0.0
    %462 = vmatpush2.msra.mxu0 %v104
    %463 = vmatprep.subr.mxu0 0.0
    %464 = vmatpush2.msra.mxu0 %v103
    %465 = vmatprep.subr.mxu0 0.0
    %466 = vmatpush2.msra.mxu0 %v102
    %467 = vmatprep.subr.mxu0 0.0
    %468 = vmatpush2.msra.mxu0 %v101
    %469 = vmatprep.subr.mxu0 0.0
    %470 = vmatpush2.msra.mxu0 %v100
    %471 = vmatprep.mubr.f32.mxu0 %v336
    %472 = vmatmul.mubr.f32.gmra.mxu0 %v329
    %v473 = vpop.f32.mrf.mxu0
    %v474 = vadd.f32 0.0, %v473
    %v475 = vpop.f32.mrf.mxu0
    %476 = vdwg.mxu0
    %v477 = vrcp.pop 128.0
    %v478 = vmul.f32 %v404, %v477
    %v479 = vmul.f32 %v474, %v477
    %v480 = vmul.f32 %v478, %v478
    %v481 = vsub.f32 %v479, %v480
    %v482 = vmax.f32 %v481, 0.0
    %v483 = vadd.f32 %v482, 1e-05
    %v484 = vrsqrt.pop %v483
    %v485 = vmul.f32 %v227, %v484
    %v486 = vmul.f32 %v478, %v485
    %v487 = vsub.f32 %v228, %v486
    %vm488 = vcmask 261120
    %v490 = vsel %vm488, %v485, 0
    %492 = vmatprep.subr.mxu0 0.0
    %493 = vmatpush1.msra.mxu0 0.0
    %494 = vmatprep.subr.mxu0 0.0
    %495 = vmatpush1.msra.mxu0 0.0
    %496 = vmatprep.subr.mxu0 0.0
    %497 = vmatpush1.msra.mxu0 0.0
    %498 = vmatprep.subr.mxu0 0.0
    %499 = vmatpush1.msra.mxu0 0.0
    %500 = vmatprep.subr.mxu0 0.0
    %501 = vmatpush1.msra.mxu0 0.0
    %502 = vmatprep.subr.mxu0 0.0
    %503 = vmatpush1.msra.mxu0 0.0
    %504 = vmatprep.subr.mxu0 0.0
    %505 = vmatpush1.msra.mxu0 0.0
    %506 = vmatprep.subr.mxu0 0.0
    %507 = vmatpush1.msra.mxu0 0.0
    %508 = vmatprep.subr.mxu0 0.0
    %509 = vmatpush1.msra.mxu0 0.0
    %510 = vmatprep.subr.mxu0 0.0
    %511 = vmatpush1.msra.mxu0 0.0
    %512 = vmatprep.subr.mxu0 0.0
    %513 = vmatpush1.msra.mxu0 0.0
    %514 = vmatprep.subr.mxu0 0.0
    %515 = vmatpush1.msra.mxu0 0.0
    %516 = vmatprep.subr.mxu0 %v123
    %517 = vmatpush1.msra.mxu0 %v122
    %518 = vmatprep.subr.mxu0 %v121
    %519 = vmatpush1.msra.mxu0 %v120
    %520 = vmatprep.subr.mxu0 %v119
    %521 = vmatpush1.msra.mxu0 %v118
    %522 = vmatprep.subr.mxu0 %v117
    %523 = vmatpush1.msra.mxu0 %v116
    %524 = vmatprep.subr.mxu0 0.0
    %525 = vmatpush2.msra.mxu0 0.0
    %526 = vmatprep.subr.mxu0 0.0
    %527 = vmatpush2.msra.mxu0 0.0
    %528 = vmatprep.subr.mxu0 0.0
    %529 = vmatpush2.msra.mxu0 0.0
    %530 = vmatprep.subr.mxu0 0.0
    %531 = vmatpush2.msra.mxu0 0.0
    %532 = vmatprep.subr.mxu0 0.0
    %533 = vmatpush2.msra.mxu0 0.0
    %534 = vmatprep.subr.mxu0 0.0
    %535 = vmatpush2.msra.mxu0 0.0
    %536 = vmatprep.subr.mxu0 0.0
    %537 = vmatpush2.msra.mxu0 0.0
    %538 = vmatprep.subr.mxu0 0.0
    %539 = vmatpush2.msra.mxu0 0.0
    %540 = vmatprep.subr.mxu0 0.0
    %541 = vmatpush2.msra.mxu0 0.0
    %542 = vmatprep.subr.mxu0 0.0
    %543 = vmatpush2.msra.mxu0 0.0
    %544 = vmatprep.subr.mxu0 0.0
    %545 = vmatpush2.msra.mxu0 0.0
    %546 = vmatprep.subr.mxu0 0.0
    %547 = vmatpush2.msra.mxu0 0.0
    %548 = vmatprep.subr.mxu0 0.0
    %549 = vmatpush2.msra.mxu0 0.0
    %550 = vmatprep.subr.mxu0 0.0
    %551 = vmatpush2.msra.mxu0 0.0
    %552 = vmatprep.subr.mxu0 0.0
    %553 = vmatpush2.msra.mxu0 0.0
    %554 = vmatprep.subr.mxu0 0.0
    %555 = vmatpush2.msra.mxu0 0.0
    %556 = vmatprep.mubr.f32.mxu0 0.0
    %557 = vmatmul.mubr.f32.gmra.mxu0 %v490
    %v558 = vpop.f32.mrf.mxu0
    %v559 = vadd.f32 0.0, %v558
    %v560 = vpop.f32.mrf.mxu0
    %v561 = vadd.f32 0.0, %v560
    %562 = vdwg.mxu0
    %v564 = vsel %vm488, %v487, 0
    %566 = vmatprep.subr.mxu0 0.0
    %567 = vmatpush1.msra.mxu0 0.0
    %568 = vmatprep.subr.mxu0 0.0
    %569 = vmatpush1.msra.mxu0 0.0
    %570 = vmatprep.subr.mxu0 0.0
    %571 = vmatpush1.msra.mxu0 0.0
    %572 = vmatprep.subr.mxu0 0.0
    %573 = vmatpush1.msra.mxu0 0.0
    %574 = vmatprep.subr.mxu0 0.0
    %575 = vmatpush1.msra.mxu0 0.0
    %576 = vmatprep.subr.mxu0 0.0
    %577 = vmatpush1.msra.mxu0 0.0
    %578 = vmatprep.subr.mxu0 0.0
    %579 = vmatpush1.msra.mxu0 0.0
    %580 = vmatprep.subr.mxu0 0.0
    %581 = vmatpush1.msra.mxu0 0.0
    %582 = vmatprep.subr.mxu0 0.0
    %583 = vmatpush1.msra.mxu0 0.0
    %584 = vmatprep.subr.mxu0 0.0
    %585 = vmatpush1.msra.mxu0 0.0
    %586 = vmatprep.subr.mxu0 0.0
    %587 = vmatpush1.msra.mxu0 0.0
    %588 = vmatprep.subr.mxu0 0.0
    %589 = vmatpush1.msra.mxu0 0.0
    %590 = vmatprep.subr.mxu0 %v123
    %591 = vmatpush1.msra.mxu0 %v122
    %592 = vmatprep.subr.mxu0 %v121
    %593 = vmatpush1.msra.mxu0 %v120
    %594 = vmatprep.subr.mxu0 %v119
    %595 = vmatpush1.msra.mxu0 %v118
    %596 = vmatprep.subr.mxu0 %v117
    %597 = vmatpush1.msra.mxu0 %v116
    %598 = vmatprep.subr.mxu0 0.0
    %599 = vmatpush2.msra.mxu0 0.0
    %600 = vmatprep.subr.mxu0 0.0
    %601 = vmatpush2.msra.mxu0 0.0
    %602 = vmatprep.subr.mxu0 0.0
    %603 = vmatpush2.msra.mxu0 0.0
    %604 = vmatprep.subr.mxu0 0.0
    %605 = vmatpush2.msra.mxu0 0.0
    %606 = vmatprep.subr.mxu0 0.0
    %607 = vmatpush2.msra.mxu0 0.0
    %608 = vmatprep.subr.mxu0 0.0
    %609 = vmatpush2.msra.mxu0 0.0
    %610 = vmatprep.subr.mxu0 0.0
    %611 = vmatpush2.msra.mxu0 0.0
    %612 = vmatprep.subr.mxu0 0.0
    %613 = vmatpush2.msra.mxu0 0.0
    %614 = vmatprep.subr.mxu0 0.0
    %615 = vmatpush2.msra.mxu0 0.0
    %616 = vmatprep.subr.mxu0 0.0
    %617 = vmatpush2.msra.mxu0 0.0
    %618 = vmatprep.subr.mxu0 0.0
    %619 = vmatpush2.msra.mxu0 0.0
    %620 = vmatprep.subr.mxu0 0.0
    %621 = vmatpush2.msra.mxu0 0.0
    %622 = vmatprep.subr.mxu0 0.0
    %623 = vmatpush2.msra.mxu0 0.0
    %624 = vmatprep.subr.mxu0 0.0
    %625 = vmatpush2.msra.mxu0 0.0
    %626 = vmatprep.subr.mxu0 0.0
    %627 = vmatpush2.msra.mxu0 0.0
    %628 = vmatprep.subr.mxu0 0.0
    %629 = vmatpush2.msra.mxu0 0.0
    %630 = vmatprep.mubr.f32.mxu0 0.0
    %631 = vmatmul.mubr.f32.gmra.mxu0 %v564
    %v632 = vpop.f32.mrf.mxu0
    %v633 = vadd.f32 0.0, %v632
    %v634 = vpop.f32.mrf.mxu0
    %v635 = vadd.f32 0.0, %v634
    %636 = vdwg.mxu0
    %v637 = vlaneseq
    %v638 = vshrl.u32 %v637, 7
    %v639 = vsub.s32 0, %v638
    %v640 = vrot.slane %v559, %v639
    %v641 = vlaneseq
    %v642 = vshrl.u32 %v641, 7
    %v643 = vsub.s32 0, %v642
    %v644 = vrot.slane %v561, %v643
    %v645 = vmul.f32 %v297, %v640
    %v646 = vmul.f32 %v299, %v644
    %v647 = vmul.f32 %v301, %v640
    %v648 = vmul.f32 %v303, %v644
    %v649 = vlaneseq
    %v650 = vshrl.u32 %v649, 7
    %v651 = vsub.s32 0, %v650
    %v652 = vrot.slane %v633, %v651
    %v653 = vlaneseq
    %v654 = vshrl.u32 %v653, 7
    %v655 = vsub.s32 0, %v654
    %v656 = vrot.slane %v635, %v655
    %v657 = vadd.f32 %v645, %v652
    %v658 = vadd.f32 %v646, %v656
    %v659 = vadd.f32 %v647, %v652
    %v660 = vadd.f32 %v648, %v656
    %v661 = vmax.f32 %v657, 0.0
    %v662 = vmax.f32 %v658, 0.0
    %v663 = vmax.f32 %v659, 0.0
    %v664 = vmax.f32 %v660, 0.0
    %v665 = vpack.c.bf16 %v663, %v661
    %v666 = vpack.c.bf16 %v664, %v662
    %v669 = vunpack.c.l.b16 %v665
    %v670 = vunpack.c.l.b16 %v666
    %v671 = vunpack.c.h.b16 %v665
    %v672 = vunpack.c.h.b16 %v666
    %v673 = vpack.c.b16 %v670, %v669
    %v674 = vpack.c.b16 %v672, %v671
    %677 = vst [vmem:[#allocation2] sm:$0xff] %v673
    %678 = vst [vmem:[#allocation2 + $0x8] sm:$0xff] %v674
    %v679 = vld [vmem:[#allocation8] sm:$0xff]
    %v680 = vld [vmem:[#allocation8 + $0x8] sm:$0xff]
    %v681 = vld [vmem:[#allocation8 + $0x10] sm:$0xff]
    %v682 = vld [vmem:[#allocation8 + $0x18] sm:$0xff]
    %v683 = vld [vmem:[#allocation8 + $0x20] sm:$0xff]
    %v684 = vld [vmem:[#allocation8 + $0x28] sm:$0xff]
    %v685 = vld [vmem:[#allocation8 + $0x30] sm:$0xff]
    %v686 = vld [vmem:[#allocation8 + $0x38] sm:$0xff]
    %v687 = vld [vmem:[#allocation8 + $0x40] sm:$0xff]
    %v688 = vld [vmem:[#allocation8 + $0x48] sm:$0xff]
    %v689 = vld [vmem:[#allocation8 + $0x50] sm:$0xff]
    %v690 = vld [vmem:[#allocation8 + $0x58] sm:$0xff]
    %v691 = vld [vmem:[#allocation8 + $0x60] sm:$0xff]
    %v692 = vld [vmem:[#allocation8 + $0x68] sm:$0xff]
    %v693 = vld [vmem:[#allocation8 + $0x70] sm:$0xff]
    %v694 = vld [vmem:[#allocation8 + $0x78] sm:$0xff]
    %v695 = vld [vmem:[#allocation8 + $0x80] sm:$0xff]
    %v696 = vld [vmem:[#allocation8 + $0x88] sm:$0xff]
    %v697 = vld [vmem:[#allocation8 + $0x90] sm:$0xff]
    %v698 = vld [vmem:[#allocation8 + $0x98] sm:$0xff]
    %v699 = vld [vmem:[#allocation8 + $0xa0] sm:$0xff]
    %v700 = vld [vmem:[#allocation8 + $0xa8] sm:$0xff]
    %v701 = vld [vmem:[#allocation8 + $0xb0] sm:$0xff]
    %v702 = vld [vmem:[#allocation8 + $0xb8] sm:$0xff]
    %v703 = vld [vmem:[#allocation8 + $0xc0] sm:$0xff]
    %v704 = vld [vmem:[#allocation8 + $0xc8] sm:$0xff]
    %v705 = vld [vmem:[#allocation8 + $0xd0] sm:$0xff]
    %v706 = vld [vmem:[#allocation8 + $0xd8] sm:$0xff]
    %v707 = vld [vmem:[#allocation8 + $0xe0] sm:$0xff]
    %v708 = vld [vmem:[#allocation8 + $0xe8] sm:$0xff]
    %v709 = vld [vmem:[#allocation8 + $0xf0] sm:$0xff]
    %v710 = vld [vmem:[#allocation8 + $0xf8] sm:$0xff]
    %v743 = vunpack.c.l.b16 %v679
    %v744 = vunpack.c.h.b16 %v679
    %v745 = vunpack.c.l.b16 %v680
    %v746 = vunpack.c.h.b16 %v680
    %v747 = vunpack.c.l.b16 %v681
    %v748 = vunpack.c.h.b16 %v681
    %v749 = vunpack.c.l.b16 %v682
    %v750 = vunpack.c.h.b16 %v682
    %v751 = vunpack.c.l.b16 %v683
    %v752 = vunpack.c.h.b16 %v683
    %v753 = vunpack.c.l.b16 %v684
    %v754 = vunpack.c.h.b16 %v684
    %v755 = vunpack.c.l.b16 %v685
    %v756 = vunpack.c.h.b16 %v685
    %v757 = vunpack.c.l.b16 %v686
    %v758 = vunpack.c.h.b16 %v686
    %v759 = vunpack.c.l.b16 %v687
    %v760 = vunpack.c.h.b16 %v687
    %v761 = vunpack.c.l.b16 %v688
    %v762 = vunpack.c.h.b16 %v688
    %v763 = vunpack.c.l.b16 %v689
    %v764 = vunpack.c.h.b16 %v689
    %v765 = vunpack.c.l.b16 %v690
    %v766 = vunpack.c.h.b16 %v690
    %v767 = vunpack.c.l.b16 %v691
    %v768 = vunpack.c.h.b16 %v691
    %v769 = vunpack.c.l.b16 %v692
    %v770 = vunpack.c.h.b16 %v692
    %v771 = vunpack.c.l.b16 %v693
    %v772 = vunpack.c.h.b16 %v693
    %v773 = vunpack.c.l.b16 %v694
    %v774 = vunpack.c.h.b16 %v694
    %v775 = vunpack.c.l.b16 %v695
    %v776 = vunpack.c.h.b16 %v695
    %v777 = vunpack.c.l.b16 %v696
    %v778 = vunpack.c.h.b16 %v696
    %v779 = vunpack.c.l.b16 %v697
    %v780 = vunpack.c.h.b16 %v697
    %v781 = vunpack.c.l.b16 %v698
    %v782 = vunpack.c.h.b16 %v698
    %v783 = vunpack.c.l.b16 %v699
    %v784 = vunpack.c.h.b16 %v699
    %v785 = vunpack.c.l.b16 %v700
    %v786 = vunpack.c.h.b16 %v700
    %v787 = vunpack.c.l.b16 %v701
    %v788 = vunpack.c.h.b16 %v701
    %v789 = vunpack.c.l.b16 %v702
    %v790 = vunpack.c.h.b16 %v702
    %v791 = vunpack.c.l.b16 %v703
    %v792 = vunpack.c.h.b16 %v703
    %v793 = vunpack.c.l.b16 %v704
    %v794 = vunpack.c.h.b16 %v704
    %v795 = vunpack.c.l.b16 %v705
    %v796 = vunpack.c.h.b16 %v705
    %v797 = vunpack.c.l.b16 %v706
    %v798 = vunpack.c.h.b16 %v706
    %v799 = vunpack.c.l.b16 %v707
    %v800 = vunpack.c.h.b16 %v707
    %v801 = vunpack.c.l.b16 %v708
    %v802 = vunpack.c.h.b16 %v708
    %v803 = vunpack.c.l.b16 %v709
    %v804 = vunpack.c.h.b16 %v709
    %v805 = vunpack.c.l.b16 %v710
    %v806 = vunpack.c.h.b16 %v710
    %v807 = vpack.c.b16 %v745, %v743
    %v808 = vpack.c.b16 %v746, %v744
    %v809 = vpack.c.b16 %v749, %v747
    %v810 = vpack.c.b16 %v750, %v748
    %v811 = vpack.c.b16 %v753, %v751
    %v812 = vpack.c.b16 %v754, %v752
    %v813 = vpack.c.b16 %v757, %v755
    %v814 = vpack.c.b16 %v758, %v756
    %v815 = vpack.c.b16 %v761, %v759
    %v816 = vpack.c.b16 %v762, %v760
    %v817 = vpack.c.b16 %v765, %v763
    %v818 = vpack.c.b16 %v766, %v764
    %v819 = vpack.c.b16 %v769, %v767
    %v820 = vpack.c.b16 %v770, %v768
    %v821 = vpack.c.b16 %v773, %v771
    %v822 = vpack.c.b16 %v774, %v772
    %v823 = vpack.c.b16 %v777, %v775
    %v824 = vpack.c.b16 %v778, %v776
    %v825 = vpack.c.b16 %v781, %v779
    %v826 = vpack.c.b16 %v782, %v780
    %v827 = vpack.c.b16 %v785, %v783
    %v828 = vpack.c.b16 %v786, %v784
    %v829 = vpack.c.b16 %v789, %v787
    %v830 = vpack.c.b16 %v790, %v788
    %v831 = vpack.c.b16 %v793, %v791
    %v832 = vpack.c.b16 %v794, %v792
    %v833 = vpack.c.b16 %v797, %v795
    %v834 = vpack.c.b16 %v798, %v796
    %v835 = vpack.c.b16 %v801, %v799
    %v836 = vpack.c.b16 %v802, %v800
    %v837 = vpack.c.b16 %v805, %v803
    %v838 = vpack.c.b16 %v806, %v804
    %871 = vmatprep.subr.bf16.mxu0 %v822
    %872 = vmatpush1.bf16.msra.mxu0 %v821
    %873 = vmatprep.subr.bf16.mxu0 %v820
    %874 = vmatpush1.bf16.msra.mxu0 %v819
    %875 = vmatprep.subr.bf16.mxu0 %v818
    %876 = vmatpush1.bf16.msra.mxu0 %v817
    %877 = vmatprep.subr.bf16.mxu0 %v816
    %878 = vmatpush1.bf16.msra.mxu0 %v815
    %879 = vmatprep.subr.bf16.mxu0 %v814
    %880 = vmatpush1.bf16.msra.mxu0 %v813
    %881 = vmatprep.subr.bf16.mxu0 %v812
    %882 = vmatpush1.bf16.msra.mxu0 %v811
    %883 = vmatprep.subr.bf16.mxu0 %v810
    %884 = vmatpush1.bf16.msra.mxu0 %v809
    %885 = vmatprep.subr.bf16.mxu0 %v808
    %886 = vmatpush1.bf16.msra.mxu0 %v807
    %887 = vmatprep.subr.bf16.mxu0 %v838
    %888 = vmatpush2.bf16.msra.mxu0 %v837
    %889 = vmatprep.subr.bf16.mxu0 %v836
    %890 = vmatpush2.bf16.msra.mxu0 %v835
    %891 = vmatprep.subr.bf16.mxu0 %v834
    %892 = vmatpush2.bf16.msra.mxu0 %v833
    %893 = vmatprep.subr.bf16.mxu0 %v832
    %894 = vmatpush2.bf16.msra.mxu0 %v831
    %895 = vmatprep.subr.bf16.mxu0 %v830
    %896 = vmatpush2.bf16.msra.mxu0 %v829
    %897 = vmatprep.subr.bf16.mxu0 %v828
    %898 = vmatpush2.bf16.msra.mxu0 %v827
    %899 = vmatprep.subr.bf16.mxu0 %v826
    %900 = vmatpush2.bf16.msra.mxu0 %v825
    %901 = vmatprep.subr.bf16.mxu0 %v824
    %902 = vmatpush2.bf16.msra.mxu0 %v823
    %903 = vmatprep.mubr.bf16.mxu0 %v666
    %904 = vmatmul.mubr.bf16.gmra.mxu0 %v665
    %v905 = vpop.f32.mrf.mxu0
    %v906 = vadd.f32 0.0, %v905
    %v907 = vpop.f32.mrf.mxu0
    %v908 = vadd.f32 0.0, %v907
    %v909 = vpop.f32.mrf.mxu0
    %v910 = vadd.f32 0.0, %v909
    %v911 = vpop.f32.mrf.mxu0
    %v912 = vadd.f32 0.0, %v911
    %913 = vdwg.mxu0
    %914 = vst [vmem:[#allocation3] sm:$0xff] %v906
    %915 = vst [vmem:[#allocation3 + $0x8] sm:$0xff] %v908
    %916 = vst [vmem:[#allocation3 + $0x10] sm:$0xff] %v910
    %917 = vst [vmem:[#allocation3 + $0x18] sm:$0xff] %v912
    loop: start=1, step=1, limit=3
    $region62: #{tpu_custom_call.1} parent=1 // loop_pre_header
      _
    $region63: #{tpu_custom_call.1} parent=1 // loop_header
      %s919 = sphi 1, %s923
      %p920 = scmp.ge.s32.totalorder %s919, 3
    $region64: #{tpu_custom_call.1} parent=1 // loop_header_branch
      %922 = sbr.rel (%p920) target = $region68
    $region65: #{tpu_custom_call.1} parent=1 // loop_body
      %v924 = vld [vmem:[#allocation3] sm:$0xff]
      %v925 = vld [vmem:[#allocation3 + $0x8] sm:$0xff]
      %v926 = vld [vmem:[#allocation3 + $0x10] sm:$0xff]
      %v927 = vld [vmem:[#allocation3 + $0x18] sm:$0xff]
      %s928 = sld [smem:[#allocation10 + %s919]]
      %s929 = scalar_lea.vmem %s6, %s919
      %v930 = vld [vmem:[%s929] sm:$0x1]
      %s931 = scalar_lea.vmem %s7, %s919
      %v932 = vld [vmem:[%s931] sm:$0x1]
      %v933 = vld [vmem:[#allocation2] sm:$0xff]
      %v934 = vld [vmem:[#allocation2 + $0x8] sm:$0xff]
      %v935 = vld [vmem:[%s1] sm:$0xf]
      %v936 = vld [vmem:[%s1 + $0x4] sm:$0xf]
      %s937 = sadd.f32 %s928, 1.0
      %v938 = vunpack.c.l.bf16 %v933
      %v939 = vunpack.c.h.bf16 %v933
      %v940 = vunpack.c.l.bf16 %v934
      %v941 = vunpack.c.h.bf16 %v934
      %v942 = vstv %s937
      %v943 = vmul.f32 %v942, %v938
      %v944 = vmul.f32 %v942, %v939
      %v945 = vmul.f32 %v942, %v940
      %v946 = vmul.f32 %v942, %v941
      %v949 = vunpack.c.l.b16 %v935
      %v950 = vunpack.c.l.b16 %v936
      %v951 = vpack.c.b16 %v950, %v949
      %v954 = vunpack.c.l.b16 %v933
      %v955 = vunpack.c.h.b16 %v933
      %v956 = vunpack.c.l.b16 %v934
      %v957 = vunpack.c.h.b16 %v934
      %v958 = vpack.c.b16 %v956, %v954
      %v959 = vpack.c.b16 %v957, %v955
      %v963 = vsel %vm258, %v951, 0
      %965 = vmatprep.subr.bf16.mxu0 0
      %966 = vmatpush1.bf16.msra.mxu0 0
      %967 = vmatprep.subr.bf16.mxu0 0
      %968 = vmatpush1.bf16.msra.mxu0 0
      %969 = vmatprep.subr.bf16.mxu0 0
      %970 = vmatpush1.bf16.msra.mxu0 0
      %971 = vmatprep.subr.bf16.mxu0 0
      %972 = vmatpush1.bf16.msra.mxu0 0
      %973 = vmatprep.subr.bf16.mxu0 0
      %974 = vmatpush1.bf16.msra.mxu0 0
      %975 = vmatprep.subr.bf16.mxu0 0
      %976 = vmatpush1.bf16.msra.mxu0 0
      %977 = vmatprep.subr.bf16.mxu0 0
      %978 = vmatpush1.bf16.msra.mxu0 0
      %979 = vmatprep.subr.bf16.mxu0 %v959
      %980 = vmatpush1.bf16.msra.mxu0 %v958
      %981 = vmatprep.subr.bf16.mxu0 0
      %982 = vmatpush2.bf16.msra.mxu0 0
      %983 = vmatprep.subr.bf16.mxu0 0
      %984 = vmatpush2.bf16.msra.mxu0 0
      %985 = vmatprep.subr.bf16.mxu0 0
      %986 = vmatpush2.bf16.msra.mxu0 0
      %987 = vmatprep.subr.bf16.mxu0 0
      %988 = vmatpush2.bf16.msra.mxu0 0
      %989 = vmatprep.subr.bf16.mxu0 0
      %990 = vmatpush2.bf16.msra.mxu0 0
      %991 = vmatprep.subr.bf16.mxu0 0
      %992 = vmatpush2.bf16.msra.mxu0 0
      %993 = vmatprep.subr.bf16.mxu0 0
      %994 = vmatpush2.bf16.msra.mxu0 0
      %995 = vmatprep.subr.bf16.mxu0 0
      %996 = vmatpush2.bf16.msra.mxu0 0
      %997 = vmatprep.mubr.bf16.mxu0 0
      %998 = vmatmul.mubr.bf16.gmra.mxu0 %v963
      %v999 = vpop.f32.mrf.mxu0
      %v1000 = vadd.f32 %v943, %v999
      %v1001 = vpop.f32.mrf.mxu0
      %v1002 = vadd.f32 %v944, %v1001
      %v1003 = vpop.f32.mrf.mxu0
      %v1004 = vadd.f32 %v945, %v1003
      %v1005 = vpop.f32.mrf.mxu0
      %v1006 = vadd.f32 %v946, %v1005
      %1007 = vdwg.mxu0
      %v1008 = vpack.c.bf16 %v1004, %v1000
      %v1009 = vpack.c.bf16 %v1006, %v1002
      %s1010 = ssub.s32 %s919, 1
      %s1011 = smul.u32 %s1010, 64
      %s1012 = smul.addr %s1011, 4
      %s1013 = scalar_lea.vmem [#allocation4], %s1012
      %v1014 = vld [vmem:[%s1013] sm:$0xff]
      %v1015 = vld [vmem:[%s1013 + $0x8] sm:$0xff]
      %v1016 = vld [vmem:[%s1013 + $0x10] sm:$0xff]
      %v1017 = vld [vmem:[%s1013 + $0x18] sm:$0xff]
      %v1018 = vld [vmem:[%s1013 + $0x20] sm:$0xff]
      %v1019 = vld [vmem:[%s1013 + $0x28] sm:$0xff]
      %v1020 = vld [vmem:[%s1013 + $0x30] sm:$0xff]
      %v1021 = vld [vmem:[%s1013 + $0x38] sm:$0xff]
      %v1022 = vld [vmem:[%s1013 + $0x40] sm:$0xff]
      %v1023 = vld [vmem:[%s1013 + $0x48] sm:$0xff]
      %v1024 = vld [vmem:[%s1013 + $0x50] sm:$0xff]
      %v1025 = vld [vmem:[%s1013 + $0x58] sm:$0xff]
      %v1026 = vld [vmem:[%s1013 + $0x60] sm:$0xff]
      %v1027 = vld [vmem:[%s1013 + $0x68] sm:$0xff]
      %v1028 = vld [vmem:[%s1013 + $0x70] sm:$0xff]
      %v1029 = vld [vmem:[%s1013 + $0x78] sm:$0xff]
      %v1030 = vld [vmem:[%s1013 + $0x80] sm:$0xff]
      %v1031 = vld [vmem:[%s1013 + $0x88] sm:$0xff]
      %v1032 = vld [vmem:[%s1013 + $0x90] sm:$0xff]
      %v1033 = vld [vmem:[%s1013 + $0x98] sm:$0xff]
      %v1034 = vld [vmem:[%s1013 + $0xa0] sm:$0xff]
      %v1035 = vld [vmem:[%s1013 + $0xa8] sm:$0xff]
      %v1036 = vld [vmem:[%s1013 + $0xb0] sm:$0xff]
      %v1037 = vld [vmem:[%s1013 + $0xb8] sm:$0xff]
      %v1038 = vld [vmem:[%s1013 + $0xc0] sm:$0xff]
      %v1039 = vld [vmem:[%s1013 + $0xc8] sm:$0xff]
      %v1040 = vld [vmem:[%s1013 + $0xd0] sm:$0xff]
      %v1041 = vld [vmem:[%s1013 + $0xd8] sm:$0xff]
      %v1042 = vld [vmem:[%s1013 + $0xe0] sm:$0xff]
      %v1043 = vld [vmem:[%s1013 + $0xe8] sm:$0xff]
      %v1044 = vld [vmem:[%s1013 + $0xf0] sm:$0xff]
      %v1045 = vld [vmem:[%s1013 + $0xf8] sm:$0xff]
      %v1078 = vunpack.c.l.b16 %v1014
      %v1079 = vunpack.c.h.b16 %v1014
      %v1080 = vunpack.c.l.b16 %v1015
      %v1081 = vunpack.c.h.b16 %v1015
      %v1082 = vunpack.c.l.b16 %v1016
      %v1083 = vunpack.c.h.b16 %v1016
      %v1084 = vunpack.c.l.b16 %v1017
      %v1085 = vunpack.c.h.b16 %v1017
      %v1086 = vunpack.c.l.b16 %v1018
      %v1087 = vunpack.c.h.b16 %v1018
      %v1088 = vunpack.c.l.b16 %v1019
      %v1089 = vunpack.c.h.b16 %v1019
      %v1090 = vunpack.c.l.b16 %v1020
      %v1091 = vunpack.c.h.b16 %v1020
      %v1092 = vunpack.c.l.b16 %v1021
      %v1093 = vunpack.c.h.b16 %v1021
      %v1094 = vunpack.c.l.b16 %v1022
      %v1095 = vunpack.c.h.b16 %v1022
      %v1096 = vunpack.c.l.b16 %v1023
      %v1097 = vunpack.c.h.b16 %v1023
      %v1098 = vunpack.c.l.b16 %v1024
      %v1099 = vunpack.c.h.b16 %v1024
      %v1100 = vunpack.c.l.b16 %v1025
      %v1101 = vunpack.c.h.b16 %v1025
      %v1102 = vunpack.c.l.b16 %v1026
      %v1103 = vunpack.c.h.b16 %v1026
      %v1104 = vunpack.c.l.b16 %v1027
      %v1105 = vunpack.c.h.b16 %v1027
      %v1106 = vunpack.c.l.b16 %v1028
      %v1107 = vunpack.c.h.b16 %v1028
      %v1108 = vunpack.c.l.b16 %v1029
      %v1109 = vunpack.c.h.b16 %v1029
      %v1110 = vunpack.c.l.b16 %v1030
      %v1111 = vunpack.c.h.b16 %v1030
      %v1112 = vunpack.c.l.b16 %v1031
      %v1113 = vunpack.c.h.b16 %v1031
      %v1114 = vunpack.c.l.b16 %v1032
      %v1115 = vunpack.c.h.b16 %v1032
      %v1116 = vunpack.c.l.b16 %v1033
      %v1117 = vunpack.c.h.b16 %v1033
      %v1118 = vunpack.c.l.b16 %v1034
      %v1119 = vunpack.c.h.b16 %v1034
      %v1120 = vunpack.c.l.b16 %v1035
      %v1121 = vunpack.c.h.b16 %v1035
      %v1122 = vunpack.c.l.b16 %v1036
      %v1123 = vunpack.c.h.b16 %v1036
      %v1124 = vunpack.c.l.b16 %v1037
      %v1125 = vunpack.c.h.b16 %v1037
      %v1126 = vunpack.c.l.b16 %v1038
      %v1127 = vunpack.c.h.b16 %v1038
      %v1128 = vunpack.c.l.b16 %v1039
      %v1129 = vunpack.c.h.b16 %v1039
      %v1130 = vunpack.c.l.b16 %v1040
      %v1131 = vunpack.c.h.b16 %v1040
      %v1132 = vunpack.c.l.b16 %v1041
      %v1133 = vunpack.c.h.b16 %v1041
      %v1134 = vunpack.c.l.b16 %v1042
      %v1135 = vunpack.c.h.b16 %v1042
      %v1136 = vunpack.c.l.b16 %v1043
      %v1137 = vunpack.c.h.b16 %v1043
      %v1138 = vunpack.c.l.b16 %v1044
      %v1139 = vunpack.c.h.b16 %v1044
      %v1140 = vunpack.c.l.b16 %v1045
      %v1141 = vunpack.c.h.b16 %v1045
      %v1142 = vpack.c.b16 %v1080, %v1078
      %v1143 = vpack.c.b16 %v1081, %v1079
      %v1144 = vpack.c.b16 %v1084, %v1082
      %v1145 = vpack.c.b16 %v1085, %v1083
      %v1146 = vpack.c.b16 %v1088, %v1086
      %v1147 = vpack.c.b16 %v1089, %v1087
      %v1148 = vpack.c.b16 %v1092, %v1090
      %v1149 = vpack.c.b16 %v1093, %v1091
      %v1150 = vpack.c.b16 %v1096, %v1094
      %v1151 = vpack.c.b16 %v1097, %v1095
      %v1152 = vpack.c.b16 %v1100, %v1098
      %v1153 = vpack.c.b16 %v1101, %v1099
      %v1154 = vpack.c.b16 %v1104, %v1102
      %v1155 = vpack.c.b16 %v1105, %v1103
      %v1156 = vpack.c.b16 %v1108, %v1106
      %v1157 = vpack.c.b16 %v1109, %v1107
      %v1158 = vpack.c.b16 %v1112, %v1110
      %v1159 = vpack.c.b16 %v1113, %v1111
      %v1160 = vpack.c.b16 %v1116, %v1114
      %v1161 = vpack.c.b16 %v1117, %v1115
      %v1162 = vpack.c.b16 %v1120, %v1118
      %v1163 = vpack.c.b16 %v1121, %v1119
      %v1164 = vpack.c.b16 %v1124, %v1122
      %v1165 = vpack.c.b16 %v1125, %v1123
      %v1166 = vpack.c.b16 %v1128, %v1126
      %v1167 = vpack.c.b16 %v1129, %v1127
      %v1168 = vpack.c.b16 %v1132, %v1130
      %v1169 = vpack.c.b16 %v1133, %v1131
      %v1170 = vpack.c.b16 %v1136, %v1134
      %v1171 = vpack.c.b16 %v1137, %v1135
      %v1172 = vpack.c.b16 %v1140, %v1138
      %v1173 = vpack.c.b16 %v1141, %v1139
      %1206 = vmatprep.subr.bf16.mxu0 %v1157
      %1207 = vmatpush1.bf16.msra.mxu0 %v1156
      %1208 = vmatprep.subr.bf16.mxu0 %v1155
      %1209 = vmatpush1.bf16.msra.mxu0 %v1154
      %1210 = vmatprep.subr.bf16.mxu0 %v1153
      %1211 = vmatpush1.bf16.msra.mxu0 %v1152
      %1212 = vmatprep.subr.bf16.mxu0 %v1151
      %1213 = vmatpush1.bf16.msra.mxu0 %v1150
      %1214 = vmatprep.subr.bf16.mxu0 %v1149
      %1215 = vmatpush1.bf16.msra.mxu0 %v1148
      %1216 = vmatprep.subr.bf16.mxu0 %v1147
      %1217 = vmatpush1.bf16.msra.mxu0 %v1146
      %1218 = vmatprep.subr.bf16.mxu0 %v1145
      %1219 = vmatpush1.bf16.msra.mxu0 %v1144
      %1220 = vmatprep.subr.bf16.mxu0 %v1143
      %1221 = vmatpush1.bf16.msra.mxu0 %v1142
      %1222 = vmatprep.subr.bf16.mxu0 %v1173
      %1223 = vmatpush2.bf16.msra.mxu0 %v1172
      %1224 = vmatprep.subr.bf16.mxu0 %v1171
      %1225 = vmatpush2.bf16.msra.mxu0 %v1170
      %1226 = vmatprep.subr.bf16.mxu0 %v1169
      %1227 = vmatpush2.bf16.msra.mxu0 %v1168
      %1228 = vmatprep.subr.bf16.mxu0 %v1167
      %1229 = vmatpush2.bf16.msra.mxu0 %v1166
      %1230 = vmatprep.subr.bf16.mxu0 %v1165
      %1231 = vmatpush2.bf16.msra.mxu0 %v1164
      %1232 = vmatprep.subr.bf16.mxu0 %v1163
      %1233 = vmatpush2.bf16.msra.mxu0 %v1162
      %1234 = vmatprep.subr.bf16.mxu0 %v1161
      %1235 = vmatpush2.bf16.msra.mxu0 %v1160
      %1236 = vmatprep.subr.bf16.mxu0 %v1159
      %1237 = vmatpush2.bf16.msra.mxu0 %v1158
      %1238 = vmatprep.mubr.bf16.mxu0 %v1009
      %1239 = vmatmul.mubr.bf16.gmra.mxu0 %v1008
      %v1240 = vpop.f32.mrf.mxu0
      %v1241 = vadd.f32 0.0, %v1240
      %v1242 = vpop.f32.mrf.mxu0
      %v1243 = vadd.f32 0.0, %v1242
      %v1244 = vpop.f32.mrf.mxu0
      %v1245 = vadd.f32 0.0, %v1244
      %v1246 = vpop.f32.mrf.mxu0
      %v1247 = vadd.f32 0.0, %v1246
      %1248 = vdwg.mxu0
      %v1249 = vadd.f32 %v1241, %v1245
      %v1250 = vrot.slane %v1249, 4
      %v1251 = vadd.f32 %v1249, %v1250
      %v1252 = vrot.slane %v1251, 2
      %v1253 = vadd.f32 %v1251, %v1252
      %v1254 = vrot.slane %v1253, 1
      %v1255 = vadd.f32 %v1253, %v1254
      %v1256 = vadd.f32 %v1243, %v1247
      %v1257 = vrot.slane %v1256, 4
      %v1258 = vadd.f32 %v1256, %v1257
      %v1259 = vrot.slane %v1258, 2
      %v1260 = vadd.f32 %v1258, %v1259
      %v1261 = vrot.slane %v1260, 1
      %v1262 = vadd.f32 %v1260, %v1261
      %v1263 = vmul.f32 %v1241, %v1241
      %v1264 = vmul.f32 %v1243, %v1243
      %v1265 = vmul.f32 %v1245, %v1245
      %v1266 = vmul.f32 %v1247, %v1247
      %v1267 = vadd.f32 %v1263, %v1265
      %v1268 = vrot.slane %v1267, 4
      %v1269 = vadd.f32 %v1267, %v1268
      %v1270 = vrot.slane %v1269, 2
      %v1271 = vadd.f32 %v1269, %v1270
      %v1272 = vrot.slane %v1271, 1
      %v1273 = vadd.f32 %v1271, %v1272
      %v1274 = vadd.f32 %v1264, %v1266
      %v1275 = vrot.slane %v1274, 4
      %v1276 = vadd.f32 %v1274, %v1275
      %v1277 = vrot.slane %v1276, 2
      %v1278 = vadd.f32 %v1276, %v1277
      %v1279 = vrot.slane %v1278, 1
      %v1280 = vadd.f32 %v1278, %v1279
      %1281 = vmatprep.subr.mxu0 0.0
      %1282 = vmatpush1.msra.mxu0 %v99
      %1283 = vmatprep.subr.mxu0 0.0
      %1284 = vmatpush1.msra.mxu0 %v98
      %1285 = vmatprep.subr.mxu0 0.0
      %1286 = vmatpush1.msra.mxu0 %v97
      %1287 = vmatprep.subr.mxu0 0.0
      %1288 = vmatpush1.msra.mxu0 %v96
      %1289 = vmatprep.subr.mxu0 0.0
      %1290 = vmatpush1.msra.mxu0 %v95
      %1291 = vmatprep.subr.mxu0 0.0
      %1292 = vmatpush1.msra.mxu0 %v94
      %1293 = vmatprep.subr.mxu0 0.0
      %1294 = vmatpush1.msra.mxu0 %v93
      %1295 = vmatprep.subr.mxu0 0.0
      %1296 = vmatpush1.msra.mxu0 %v92
      %1297 = vmatprep.subr.mxu0 0.0
      %1298 = vmatpush1.msra.mxu0 %v91
      %1299 = vmatprep.subr.mxu0 0.0
      %1300 = vmatpush1.msra.mxu0 %v90
      %1301 = vmatprep.subr.mxu0 0.0
      %1302 = vmatpush1.msra.mxu0 %v89
      %1303 = vmatprep.subr.mxu0 0.0
      %1304 = vmatpush1.msra.mxu0 %v88
      %1305 = vmatprep.subr.mxu0 0.0
      %1306 = vmatpush1.msra.mxu0 %v87
      %1307 = vmatprep.subr.mxu0 0.0
      %1308 = vmatpush1.msra.mxu0 %v86
      %1309 = vmatprep.subr.mxu0 0.0
      %1310 = vmatpush1.msra.mxu0 %v85
      %1311 = vmatprep.subr.mxu0 0.0
      %1312 = vmatpush1.msra.mxu0 %v84
      %1313 = vmatprep.subr.mxu0 0.0
      %1314 = vmatpush2.msra.mxu0 %v115
      %1315 = vmatprep.subr.mxu0 0.0
      %1316 = vmatpush2.msra.mxu0 %v114
      %1317 = vmatprep.subr.mxu0 0.0
      %1318 = vmatpush2.msra.mxu0 %v113
      %1319 = vmatprep.subr.mxu0 0.0
      %1320 = vmatpush2.msra.mxu0 %v112
      %1321 = vmatprep.subr.mxu0 0.0
      %1322 = vmatpush2.msra.mxu0 %v111
      %1323 = vmatprep.subr.mxu0 0.0
      %1324 = vmatpush2.msra.mxu0 %v110
      %1325 = vmatprep.subr.mxu0 0.0
      %1326 = vmatpush2.msra.mxu0 %v109
      %1327 = vmatprep.subr.mxu0 0.0
      %1328 = vmatpush2.msra.mxu0 %v108
      %1329 = vmatprep.subr.mxu0 0.0
      %1330 = vmatpush2.msra.mxu0 %v107
      %1331 = vmatprep.subr.mxu0 0.0
      %1332 = vmatpush2.msra.mxu0 %v106
      %1333 = vmatprep.subr.mxu0 0.0
      %1334 = vmatpush2.msra.mxu0 %v105
      %1335 = vmatprep.subr.mxu0 0.0
      %1336 = vmatpush2.msra.mxu0 %v104
      %1337 = vmatprep.subr.mxu0 0.0
      %1338 = vmatpush2.msra.mxu0 %v103
      %1339 = vmatprep.subr.mxu0 0.0
      %1340 = vmatpush2.msra.mxu0 %v102
      %1341 = vmatprep.subr.mxu0 0.0
      %1342 = vmatpush2.msra.mxu0 %v101
      %1343 = vmatprep.subr.mxu0 0.0
      %1344 = vmatpush2.msra.mxu0 %v100
      %1345 = vmatprep.mubr.f32.mxu0 %v1262
      %1346 = vmatmul.mubr.f32.gmra.mxu0 %v1255
      %v1347 = vpop.f32.mrf.mxu0
      %v1348 = vadd.f32 0.0, %v1347
      %v1349 = vpop.f32.mrf.mxu0
      %1350 = vdwg.mxu0
      %1351 = vmatprep.subr.mxu0 0.0
      %1352 = vmatpush1.msra.mxu0 %v99
      %1353 = vmatprep.subr.mxu0 0.0
      %1354 = vmatpush1.msra.mxu0 %v98
      %1355 = vmatprep.subr.mxu0 0.0
      %1356 = vmatpush1.msra.mxu0 %v97
      %1357 = vmatprep.subr.mxu0 0.0
      %1358 = vmatpush1.msra.mxu0 %v96
      %1359 = vmatprep.subr.mxu0 0.0
      %1360 = vmatpush1.msra.mxu0 %v95
      %1361 = vmatprep.subr.mxu0 0.0
      %1362 = vmatpush1.msra.mxu0 %v94
      %1363 = vmatprep.subr.mxu0 0.0
      %1364 = vmatpush1.msra.mxu0 %v93
      %1365 = vmatprep.subr.mxu0 0.0
      %1366 = vmatpush1.msra.mxu0 %v92
      %1367 = vmatprep.subr.mxu0 0.0
      %1368 = vmatpush1.msra.mxu0 %v91
      %1369 = vmatprep.subr.mxu0 0.0
      %1370 = vmatpush1.msra.mxu0 %v90
      %1371 = vmatprep.subr.mxu0 0.0
      %1372 = vmatpush1.msra.mxu0 %v89
      %1373 = vmatprep.subr.mxu0 0.0
      %1374 = vmatpush1.msra.mxu0 %v88
      %1375 = vmatprep.subr.mxu0 0.0
      %1376 = vmatpush1.msra.mxu0 %v87
      %1377 = vmatprep.subr.mxu0 0.0
      %1378 = vmatpush1.msra.mxu0 %v86
      %1379 = vmatprep.subr.mxu0 0.0
      %1380 = vmatpush1.msra.mxu0 %v85
      %1381 = vmatprep.subr.mxu0 0.0
      %1382 = vmatpush1.msra.mxu0 %v84
      %1383 = vmatprep.subr.mxu0 0.0
      %1384 = vmatpush2.msra.mxu0 %v115
      %1385 = vmatprep.subr.mxu0 0.0
      %1386 = vmatpush2.msra.mxu0 %v114
      %1387 = vmatprep.subr.mxu0 0.0
      %1388 = vmatpush2.msra.mxu0 %v113
      %1389 = vmatprep.subr.mxu0 0.0
      %1390 = vmatpush2.msra.mxu0 %v112
      %1391 = vmatprep.subr.mxu0 0.0
      %1392 = vmatpush2.msra.mxu0 %v111
      %1393 = vmatprep.subr.mxu0 0.0
      %1394 = vmatpush2.msra.mxu0 %v110
      %1395 = vmatprep.subr.mxu0 0.0
      %1396 = vmatpush2.msra.mxu0 %v109
      %1397 = vmatprep.subr.mxu0 0.0
      %1398 = vmatpush2.msra.mxu0 %v108
      %1399 = vmatprep.subr.mxu0 0.0
      %1400 = vmatpush2.msra.mxu0 %v107
      %1401 = vmatprep.subr.mxu0 0.0
      %1402 = vmatpush2.msra.mxu0 %v106
      %1403 = vmatprep.subr.mxu0 0.0
      %1404 = vmatpush2.msra.mxu0 %v105
      %1405 = vmatprep.subr.mxu0 0.0
      %1406 = vmatpush2.msra.mxu0 %v104
      %1407 = vmatprep.subr.mxu0 0.0
      %1408 = vmatpush2.msra.mxu0 %v103
      %1409 = vmatprep.subr.mxu0 0.0
      %1410 = vmatpush2.msra.mxu0 %v102
      %1411 = vmatprep.subr.mxu0 0.0
      %1412 = vmatpush2.msra.mxu0 %v101
      %1413 = vmatprep.subr.mxu0 0.0
      %1414 = vmatpush2.msra.mxu0 %v100
      %1415 = vmatprep.mubr.f32.mxu0 %v1280
      %1416 = vmatmul.mubr.f32.gmra.mxu0 %v1273
      %v1417 = vpop.f32.mrf.mxu0
      %v1418 = vadd.f32 0.0, %v1417
      %v1419 = vpop.f32.mrf.mxu0
      %1420 = vdwg.mxu0
      %v1421 = vmul.f32 %v1348, %v477
      %v1422 = vmul.f32 %v1418, %v477
      %v1423 = vmul.f32 %v1421, %v1421
      %v1424 = vsub.f32 %v1422, %v1423
      %v1425 = vmax.f32 %v1424, 0.0
      %v1426 = vadd.f32 %v1425, 1e-05
      %v1427 = vrsqrt.pop %v1426
      %v1428 = vmul.f32 %v930, %v1427
      %v1429 = vmul.f32 %v1421, %v1428
      %v1430 = vsub.f32 %v932, %v1429
      %v1432 = vsel %vm488, %v1428, 0
      %1434 = vmatprep.subr.mxu0 0.0
      %1435 = vmatpush1.msra.mxu0 0.0
      %1436 = vmatprep.subr.mxu0 0.0
      %1437 = vmatpush1.msra.mxu0 0.0
      %1438 = vmatprep.subr.mxu0 0.0
      %1439 = vmatpush1.msra.mxu0 0.0
      %1440 = vmatprep.subr.mxu0 0.0
      %1441 = vmatpush1.msra.mxu0 0.0
      %1442 = vmatprep.subr.mxu0 0.0
      %1443 = vmatpush1.msra.mxu0 0.0
      %1444 = vmatprep.subr.mxu0 0.0
      %1445 = vmatpush1.msra.mxu0 0.0
      %1446 = vmatprep.subr.mxu0 0.0
      %1447 = vmatpush1.msra.mxu0 0.0
      %1448 = vmatprep.subr.mxu0 0.0
      %1449 = vmatpush1.msra.mxu0 0.0
      %1450 = vmatprep.subr.mxu0 0.0
      %1451 = vmatpush1.msra.mxu0 0.0
      %1452 = vmatprep.subr.mxu0 0.0
      %1453 = vmatpush1.msra.mxu0 0.0
      %1454 = vmatprep.subr.mxu0 0.0
      %1455 = vmatpush1.msra.mxu0 0.0
      %1456 = vmatprep.subr.mxu0 0.0
      %1457 = vmatpush1.msra.mxu0 0.0
      %1458 = vmatprep.subr.mxu0 %v123
      %1459 = vmatpush1.msra.mxu0 %v122
      %1460 = vmatprep.subr.mxu0 %v121
      %1461 = vmatpush1.msra.mxu0 %v120
      %1462 = vmatprep.subr.mxu0 %v119
      %1463 = vmatpush1.msra.mxu0 %v118
      %1464 = vmatprep.subr.mxu0 %v117
      %1465 = vmatpush1.msra.mxu0 %v116
      %1466 = vmatprep.subr.mxu0 0.0
      %1467 = vmatpush2.msra.mxu0 0.0
      %1468 = vmatprep.subr.mxu0 0.0
      %1469 = vmatpush2.msra.mxu0 0.0
      %1470 = vmatprep.subr.mxu0 0.0
      %1471 = vmatpush2.msra.mxu0 0.0
      %1472 = vmatprep.subr.mxu0 0.0
      %1473 = vmatpush2.msra.mxu0 0.0
      %1474 = vmatprep.subr.mxu0 0.0
      %1475 = vmatpush2.msra.mxu0 0.0
      %1476 = vmatprep.subr.mxu0 0.0
      %1477 = vmatpush2.msra.mxu0 0.0
      %1478 = vmatprep.subr.mxu0 0.0
      %1479 = vmatpush2.msra.mxu0 0.0
      %1480 = vmatprep.subr.mxu0 0.0
      %1481 = vmatpush2.msra.mxu0 0.0
      %1482 = vmatprep.subr.mxu0 0.0
      %1483 = vmatpush2.msra.mxu0 0.0
      %1484 = vmatprep.subr.mxu0 0.0
      %1485 = vmatpush2.msra.mxu0 0.0
      %1486 = vmatprep.subr.mxu0 0.0
      %1487 = vmatpush2.msra.mxu0 0.0
      %1488 = vmatprep.subr.mxu0 0.0
      %1489 = vmatpush2.msra.mxu0 0.0
      %1490 = vmatprep.subr.mxu0 0.0
      %1491 = vmatpush2.msra.mxu0 0.0
      %1492 = vmatprep.subr.mxu0 0.0
      %1493 = vmatpush2.msra.mxu0 0.0
      %1494 = vmatprep.subr.mxu0 0.0
      %1495 = vmatpush2.msra.mxu0 0.0
      %1496 = vmatprep.subr.mxu0 0.0
      %1497 = vmatpush2.msra.mxu0 0.0
      %1498 = vmatprep.mubr.f32.mxu0 0.0
      %1499 = vmatmul.mubr.f32.gmra.mxu0 %v1432
      %v1500 = vpop.f32.mrf.mxu0
      %v1501 = vadd.f32 0.0, %v1500
      %v1502 = vpop.f32.mrf.mxu0
      %v1503 = vadd.f32 0.0, %v1502
      %1504 = vdwg.mxu0
      %v1506 = vsel %vm488, %v1430, 0
      %1508 = vmatprep.subr.mxu0 0.0
      %1509 = vmatpush1.msra.mxu0 0.0
      %1510 = vmatprep.subr.mxu0 0.0
      %1511 = vmatpush1.msra.mxu0 0.0
      %1512 = vmatprep.subr.mxu0 0.0
      %1513 = vmatpush1.msra.mxu0 0.0
      %1514 = vmatprep.subr.mxu0 0.0
      %1515 = vmatpush1.msra.mxu0 0.0
      %1516 = vmatprep.subr.mxu0 0.0
      %1517 = vmatpush1.msra.mxu0 0.0
      %1518 = vmatprep.subr.mxu0 0.0
      %1519 = vmatpush1.msra.mxu0 0.0
      %1520 = vmatprep.subr.mxu0 0.0
      %1521 = vmatpush1.msra.mxu0 0.0
      %1522 = vmatprep.subr.mxu0 0.0
      %1523 = vmatpush1.msra.mxu0 0.0
      %1524 = vmatprep.subr.mxu0 0.0
      %1525 = vmatpush1.msra.mxu0 0.0
      %1526 = vmatprep.subr.mxu0 0.0
      %1527 = vmatpush1.msra.mxu0 0.0
      %1528 = vmatprep.subr.mxu0 0.0
      %1529 = vmatpush1.msra.mxu0 0.0
      %1530 = vmatprep.subr.mxu0 0.0
      %1531 = vmatpush1.msra.mxu0 0.0
      %1532 = vmatprep.subr.mxu0 %v123
      %1533 = vmatpush1.msra.mxu0 %v122
      %1534 = vmatprep.subr.mxu0 %v121
      %1535 = vmatpush1.msra.mxu0 %v120
      %1536 = vmatprep.subr.mxu0 %v119
      %1537 = vmatpush1.msra.mxu0 %v118
      %1538 = vmatprep.subr.mxu0 %v117
      %1539 = vmatpush1.msra.mxu0 %v116
      %1540 = vmatprep.subr.mxu0 0.0
      %1541 = vmatpush2.msra.mxu0 0.0
      %1542 = vmatprep.subr.mxu0 0.0
      %1543 = vmatpush2.msra.mxu0 0.0
      %1544 = vmatprep.subr.mxu0 0.0
      %1545 = vmatpush2.msra.mxu0 0.0
      %1546 = vmatprep.subr.mxu0 0.0
      %1547 = vmatpush2.msra.mxu0 0.0
      %1548 = vmatprep.subr.mxu0 0.0
      %1549 = vmatpush2.msra.mxu0 0.0
      %1550 = vmatprep.subr.mxu0 0.0
      %1551 = vmatpush2.msra.mxu0 0.0
      %1552 = vmatprep.subr.mxu0 0.0
      %1553 = vmatpush2.msra.mxu0 0.0
      %1554 = vmatprep.subr.mxu0 0.0
      %1555 = vmatpush2.msra.mxu0 0.0
      %1556 = vmatprep.subr.mxu0 0.0
      %1557 = vmatpush2.msra.mxu0 0.0
      %1558 = vmatprep.subr.mxu0 0.0
      %1559 = vmatpush2.msra.mxu0 0.0
      %1560 = vmatprep.subr.mxu0 0.0
      %1561 = vmatpush2.msra.mxu0 0.0
      %1562 = vmatprep.subr.mxu0 0.0
      %1563 = vmatpush2.msra.mxu0 0.0
      %1564 = vmatprep.subr.mxu0 0.0
      %1565 = vmatpush2.msra.mxu0 0.0
      %1566 = vmatprep.subr.mxu0 0.0
      %1567 = vmatpush2.msra.mxu0 0.0
      %1568 = vmatprep.subr.mxu0 0.0
      %1569 = vmatpush2.msra.mxu0 0.0
      %1570 = vmatprep.subr.mxu0 0.0
      %1571 = vmatpush2.msra.mxu0 0.0
      %1572 = vmatprep.mubr.f32.mxu0 0.0
      %1573 = vmatmul.mubr.f32.gmra.mxu0 %v1506
      %v1574 = vpop.f32.mrf.mxu0
      %v1575 = vadd.f32 0.0, %v1574
      %v1576 = vpop.f32.mrf.mxu0
      %v1577 = vadd.f32 0.0, %v1576
      %1578 = vdwg.mxu0
      %v1579 = vlaneseq
      %v1580 = vshrl.u32 %v1579, 7
      %v1581 = vsub.s32 0, %v1580
      %v1582 = vrot.slane %v1501, %v1581
      %v1583 = vlaneseq
      %v1584 = vshrl.u32 %v1583, 7
      %v1585 = vsub.s32 0, %v1584
      %v1586 = vrot.slane %v1503, %v1585
      %v1587 = vmul.f32 %v1241, %v1582
      %v1588 = vmul.f32 %v1243, %v1586
      %v1589 = vmul.f32 %v1245, %v1582
      %v1590 = vmul.f32 %v1247, %v1586
      %v1591 = vlaneseq
      %v1592 = vshrl.u32 %v1591, 7
      %v1593 = vsub.s32 0, %v1592
      %v1594 = vrot.slane %v1575, %v1593
      %v1595 = vlaneseq
      %v1596 = vshrl.u32 %v1595, 7
      %v1597 = vsub.s32 0, %v1596
      %v1598 = vrot.slane %v1577, %v1597
      %v1599 = vadd.f32 %v1587, %v1594
      %v1600 = vadd.f32 %v1588, %v1598
      %v1601 = vadd.f32 %v1589, %v1594
      %v1602 = vadd.f32 %v1590, %v1598
      %v1603 = vmax.f32 %v1599, 0.0
      %v1604 = vmax.f32 %v1600, 0.0
      %v1605 = vmax.f32 %v1601, 0.0
      %v1606 = vmax.f32 %v1602, 0.0
      %v1607 = vpack.c.bf16 %v1605, %v1603
      %v1608 = vpack.c.bf16 %v1606, %v1604
      %v1611 = vunpack.c.l.b16 %v1607
      %v1612 = vunpack.c.l.b16 %v1608
      %v1613 = vunpack.c.h.b16 %v1607
      %v1614 = vunpack.c.h.b16 %v1608
      %v1615 = vpack.c.b16 %v1612, %v1611
      %v1616 = vpack.c.b16 %v1614, %v1613
      %1619 = vst [vmem:[#allocation2] sm:$0xff] %v1615
      %1620 = vst [vmem:[#allocation2 + $0x8] sm:$0xff] %v1616
      %s1621 = smul.u32 %s919, 64
      %s1622 = smul.addr %s1621, 4
      %s1623 = scalar_lea.vmem [#allocation8], %s1622
      %v1624 = vld [vmem:[%s1623] sm:$0xff]
      %v1625 = vld [vmem:[%s1623 + $0x8] sm:$0xff]
      %v1626 = vld [vmem:[%s1623 + $0x10] sm:$0xff]
      %v1627 = vld [vmem:[%s1623 + $0x18] sm:$0xff]
      %v1628 = vld [vmem:[%s1623 + $0x20] sm:$0xff]
      %v1629 = vld [vmem:[%s1623 + $0x28] sm:$0xff]
      %v1630 = vld [vmem:[%s1623 + $0x30] sm:$0xff]
      %v1631 = vld [vmem:[%s1623 + $0x38] sm:$0xff]
      %v1632 = vld [vmem:[%s1623 + $0x40] sm:$0xff]
      %v1633 = vld [vmem:[%s1623 + $0x48] sm:$0xff]
      %v1634 = vld [vmem:[%s1623 + $0x50] sm:$0xff]
      %v1635 = vld [vmem:[%s1623 + $0x58] sm:$0xff]
      %v1636 = vld [vmem:[%s1623 + $0x60] sm:$0xff]
      %v1637 = vld [vmem:[%s1623 + $0x68] sm:$0xff]
      %v1638 = vld [vmem:[%s1623 + $0x70] sm:$0xff]
      %v1639 = vld [vmem:[%s1623 + $0x78] sm:$0xff]
      %v1640 = vld [vmem:[%s1623 + $0x80] sm:$0xff]
      %v1641 = vld [vmem:[%s1623 + $0x88] sm:$0xff]
      %v1642 = vld [vmem:[%s1623 + $0x90] sm:$0xff]
      %v1643 = vld [vmem:[%s1623 + $0x98] sm:$0xff]
      %v1644 = vld [vmem:[%s1623 + $0xa0] sm:$0xff]
      %v1645 = vld [vmem:[%s1623 + $0xa8] sm:$0xff]
      %v1646 = vld [vmem:[%s1623 + $0xb0] sm:$0xff]
      %v1647 = vld [vmem:[%s1623 + $0xb8] sm:$0xff]
      %v1648 = vld [vmem:[%s1623 + $0xc0] sm:$0xff]
      %v1649 = vld [vmem:[%s1623 + $0xc8] sm:$0xff]
      %v1650 = vld [vmem:[%s1623 + $0xd0] sm:$0xff]
      %v1651 = vld [vmem:[%s1623 + $0xd8] sm:$0xff]
      %v1652 = vld [vmem:[%s1623 + $0xe0] sm:$0xff]
      %v1653 = vld [vmem:[%s1623 + $0xe8] sm:$0xff]
      %v1654 = vld [vmem:[%s1623 + $0xf0] sm:$0xff]
      %v1655 = vld [vmem:[%s1623 + $0xf8] sm:$0xff]
      %v1688 = vunpack.c.l.b16 %v1624
      %v1689 = vunpack.c.h.b16 %v1624
      %v1690 = vunpack.c.l.b16 %v1625
      %v1691 = vunpack.c.h.b16 %v1625
      %v1692 = vunpack.c.l.b16 %v1626
      %v1693 = vunpack.c.h.b16 %v1626
      %v1694 = vunpack.c.l.b16 %v1627
      %v1695 = vunpack.c.h.b16 %v1627
      %v1696 = vunpack.c.l.b16 %v1628
      %v1697 = vunpack.c.h.b16 %v1628
      %v1698 = vunpack.c.l.b16 %v1629
      %v1699 = vunpack.c.h.b16 %v1629
      %v1700 = vunpack.c.l.b16 %v1630
      %v1701 = vunpack.c.h.b16 %v1630
      %v1702 = vunpack.c.l.b16 %v1631
      %v1703 = vunpack.c.h.b16 %v1631
      %v1704 = vunpack.c.l.b16 %v1632
      %v1705 = vunpack.c.h.b16 %v1632
      %v1706 = vunpack.c.l.b16 %v1633
      %v1707 = vunpack.c.h.b16 %v1633
      %v1708 = vunpack.c.l.b16 %v1634
      %v1709 = vunpack.c.h.b16 %v1634
      %v1710 = vunpack.c.l.b16 %v1635
      %v1711 = vunpack.c.h.b16 %v1635
      %v1712 = vunpack.c.l.b16 %v1636
      %v1713 = vunpack.c.h.b16 %v1636
      %v1714 = vunpack.c.l.b16 %v1637
      %v1715 = vunpack.c.h.b16 %v1637
      %v1716 = vunpack.c.l.b16 %v1638
      %v1717 = vunpack.c.h.b16 %v1638
      %v1718 = vunpack.c.l.b16 %v1639
      %v1719 = vunpack.c.h.b16 %v1639
      %v1720 = vunpack.c.l.b16 %v1640
      %v1721 = vunpack.c.h.b16 %v1640
      %v1722 = vunpack.c.l.b16 %v1641
      %v1723 = vunpack.c.h.b16 %v1641
      %v1724 = vunpack.c.l.b16 %v1642
      %v1725 = vunpack.c.h.b16 %v1642
      %v1726 = vunpack.c.l.b16 %v1643
      %v1727 = vunpack.c.h.b16 %v1643
      %v1728 = vunpack.c.l.b16 %v1644
      %v1729 = vunpack.c.h.b16 %v1644
      %v1730 = vunpack.c.l.b16 %v1645
      %v1731 = vunpack.c.h.b16 %v1645
      %v1732 = vunpack.c.l.b16 %v1646
      %v1733 = vunpack.c.h.b16 %v1646
      %v1734 = vunpack.c.l.b16 %v1647
      %v1735 = vunpack.c.h.b16 %v1647
      %v1736 = vunpack.c.l.b16 %v1648
      %v1737 = vunpack.c.h.b16 %v1648
      %v1738 = vunpack.c.l.b16 %v1649
      %v1739 = vunpack.c.h.b16 %v1649
      %v1740 = vunpack.c.l.b16 %v1650
      %v1741 = vunpack.c.h.b16 %v1650
      %v1742 = vunpack.c.l.b16 %v1651
      %v1743 = vunpack.c.h.b16 %v1651
      %v1744 = vunpack.c.l.b16 %v1652
      %v1745 = vunpack.c.h.b16 %v1652
      %v1746 = vunpack.c.l.b16 %v1653
      %v1747 = vunpack.c.h.b16 %v1653
      %v1748 = vunpack.c.l.b16 %v1654
      %v1749 = vunpack.c.h.b16 %v1654
      %v1750 = vunpack.c.l.b16 %v1655
      %v1751 = vunpack.c.h.b16 %v1655
      %v1752 = vpack.c.b16 %v1690, %v1688
      %v1753 = vpack.c.b16 %v1691, %v1689
      %v1754 = vpack.c.b16 %v1694, %v1692
      %v1755 = vpack.c.b16 %v1695, %v1693
      %v1756 = vpack.c.b16 %v1698, %v1696
      %v1757 = vpack.c.b16 %v1699, %v1697
      %v1758 = vpack.c.b16 %v1702, %v1700
      %v1759 = vpack.c.b16 %v1703, %v1701
      %v1760 = vpack.c.b16 %v1706, %v1704
      %v1761 = vpack.c.b16 %v1707, %v1705
      %v1762 = vpack.c.b16 %v1710, %v1708
      %v1763 = vpack.c.b16 %v1711, %v1709
      %v1764 = vpack.c.b16 %v1714, %v1712
      %v1765 = vpack.c.b16 %v1715, %v1713
      %v1766 = vpack.c.b16 %v1718, %v1716
      %v1767 = vpack.c.b16 %v1719, %v1717
      %v1768 = vpack.c.b16 %v1722, %v1720
      %v1769 = vpack.c.b16 %v1723, %v1721
      %v1770 = vpack.c.b16 %v1726, %v1724
      %v1771 = vpack.c.b16 %v1727, %v1725
      %v1772 = vpack.c.b16 %v1730, %v1728
      %v1773 = vpack.c.b16 %v1731, %v1729
      %v1774 = vpack.c.b16 %v1734, %v1732
      %v1775 = vpack.c.b16 %v1735, %v1733
      %v1776 = vpack.c.b16 %v1738, %v1736
      %v1777 = vpack.c.b16 %v1739, %v1737
      %v1778 = vpack.c.b16 %v1742, %v1740
      %v1779 = vpack.c.b16 %v1743, %v1741
      %v1780 = vpack.c.b16 %v1746, %v1744
      %v1781 = vpack.c.b16 %v1747, %v1745
      %v1782 = vpack.c.b16 %v1750, %v1748
      %v1783 = vpack.c.b16 %v1751, %v1749
      %1816 = vmatprep.subr.bf16.mxu0 %v1767
      %1817 = vmatpush1.bf16.msra.mxu0 %v1766
      %1818 = vmatprep.subr.bf16.mxu0 %v1765
      %1819 = vmatpush1.bf16.msra.mxu0 %v1764
      %1820 = vmatprep.subr.bf16.mxu0 %v1763
      %1821 = vmatpush1.bf16.msra.mxu0 %v1762
      %1822 = vmatprep.subr.bf16.mxu0 %v1761
      %1823 = vmatpush1.bf16.msra.mxu0 %v1760
      %1824 = vmatprep.subr.bf16.mxu0 %v1759
      %1825 = vmatpush1.bf16.msra.mxu0 %v1758
      %1826 = vmatprep.subr.bf16.mxu0 %v1757
      %1827 = vmatpush1.bf16.msra.mxu0 %v1756
      %1828 = vmatprep.subr.bf16.mxu0 %v1755
      %1829 = vmatpush1.bf16.msra.mxu0 %v1754
      %1830 = vmatprep.subr.bf16.mxu0 %v1753
      %1831 = vmatpush1.bf16.msra.mxu0 %v1752
      %1832 = vmatprep.subr.bf16.mxu0 %v1783
      %1833 = vmatpush2.bf16.msra.mxu0 %v1782
      %1834 = vmatprep.subr.bf16.mxu0 %v1781
      %1835 = vmatpush2.bf16.msra.mxu0 %v1780
      %1836 = vmatprep.subr.bf16.mxu0 %v1779
      %1837 = vmatpush2.bf16.msra.mxu0 %v1778
      %1838 = vmatprep.subr.bf16.mxu0 %v1777
      %1839 = vmatpush2.bf16.msra.mxu0 %v1776
      %1840 = vmatprep.subr.bf16.mxu0 %v1775
      %1841 = vmatpush2.bf16.msra.mxu0 %v1774
      %1842 = vmatprep.subr.bf16.mxu0 %v1773
      %1843 = vmatpush2.bf16.msra.mxu0 %v1772
      %1844 = vmatprep.subr.bf16.mxu0 %v1771
      %1845 = vmatpush2.bf16.msra.mxu0 %v1770
      %1846 = vmatprep.subr.bf16.mxu0 %v1769
      %1847 = vmatpush2.bf16.msra.mxu0 %v1768
      %1848 = vmatprep.mubr.bf16.mxu0 %v1608
      %1849 = vmatmul.mubr.bf16.gmra.mxu0 %v1607
      %v1850 = vpop.f32.mrf.mxu0
      %v1851 = vadd.f32 0.0, %v1850
      %v1852 = vpop.f32.mrf.mxu0
      %v1853 = vadd.f32 0.0, %v1852
      %v1854 = vpop.f32.mrf.mxu0
      %v1855 = vadd.f32 0.0, %v1854
      %v1856 = vpop.f32.mrf.mxu0
      %v1857 = vadd.f32 0.0, %v1856
      %1858 = vdwg.mxu0
      %v1859 = vadd.f32 %v924, %v1851
      %v1860 = vadd.f32 %v925, %v1853
      %v1861 = vadd.f32 %v926, %v1855
      %v1862 = vadd.f32 %v927, %v1857
      %1863 = vst [vmem:[#allocation3] sm:$0xff] %v1859
      %1864 = vst [vmem:[#allocation3 + $0x8] sm:$0xff] %v1860
      %1865 = vst [vmem:[#allocation3 + $0x10] sm:$0xff] %v1861
      %1866 = vst [vmem:[#allocation3 + $0x18] sm:$0xff] %v1862
    $region66: #{tpu_custom_call.1} parent=1 // loop_footer
      %s923 = sadd.s32 1, %s919
    $region67: #{tpu_custom_call.1} parent=1 // loop_footer_branch
      %918 = sbr.rel target = $region63
    $region68: #{tpu_custom_call.1} parent=1 // loop_exit
      _
    %v1867 = vld [vmem:[#allocation3] sm:$0xff]
    %v1868 = vld [vmem:[#allocation3 + $0x8] sm:$0xff]
    %v1869 = vld [vmem:[#allocation3 + $0x10] sm:$0xff]
    %v1870 = vld [vmem:[#allocation3 + $0x18] sm:$0xff]
    %v1871 = vld [vmem:[%s8] sm:$0x1]
    %v1872 = vld [vmem:[%s9] sm:$0x1]
    %v1873 = vadd.f32 %v1867, %v1869
    %v1874 = vrot.slane %v1873, 4
    %v1875 = vadd.f32 %v1873, %v1874
    %v1876 = vrot.slane %v1875, 2
    %v1877 = vadd.f32 %v1875, %v1876
    %v1878 = vrot.slane %v1877, 1
    %v1879 = vadd.f32 %v1877, %v1878
    %v1880 = vadd.f32 %v1868, %v1870
    %v1881 = vrot.slane %v1880, 4
    %v1882 = vadd.f32 %v1880, %v1881
    %v1883 = vrot.slane %v1882, 2
    %v1884 = vadd.f32 %v1882, %v1883
    %v1885 = vrot.slane %v1884, 1
    %v1886 = vadd.f32 %v1884, %v1885
    %v1887 = vmul.f32 %v1867, %v1867
    %v1888 = vmul.f32 %v1868, %v1868
    %v1889 = vmul.f32 %v1869, %v1869
    %v1890 = vmul.f32 %v1870, %v1870
    %v1891 = vadd.f32 %v1887, %v1889
    %v1892 = vrot.slane %v1891, 4
    %v1893 = vadd.f32 %v1891, %v1892
    %v1894 = vrot.slane %v1893, 2
    %v1895 = vadd.f32 %v1893, %v1894
    %v1896 = vrot.slane %v1895, 1
    %v1897 = vadd.f32 %v1895, %v1896
    %v1898 = vadd.f32 %v1888, %v1890
    %v1899 = vrot.slane %v1898, 4
    %v1900 = vadd.f32 %v1898, %v1899
    %v1901 = vrot.slane %v1900, 2
    %v1902 = vadd.f32 %v1900, %v1901
    %v1903 = vrot.slane %v1902, 1
    %v1904 = vadd.f32 %v1902, %v1903
    %1905 = vmatprep.subr.mxu0 0.0
    %1906 = vmatpush1.msra.mxu0 %v99
    %1907 = vmatprep.subr.mxu0 0.0
    %1908 = vmatpush1.msra.mxu0 %v98
    %1909 = vmatprep.subr.mxu0 0.0
    %1910 = vmatpush1.msra.mxu0 %v97
    %1911 = vmatprep.subr.mxu0 0.0
    %1912 = vmatpush1.msra.mxu0 %v96
    %1913 = vmatprep.subr.mxu0 0.0
    %1914 = vmatpush1.msra.mxu0 %v95
    %1915 = vmatprep.subr.mxu0 0.0
    %1916 = vmatpush1.msra.mxu0 %v94
    %1917 = vmatprep.subr.mxu0 0.0
    %1918 = vmatpush1.msra.mxu0 %v93
    %1919 = vmatprep.subr.mxu0 0.0
    %1920 = vmatpush1.msra.mxu0 %v92
    %1921 = vmatprep.subr.mxu0 0.0
    %1922 = vmatpush1.msra.mxu0 %v91
    %1923 = vmatprep.subr.mxu0 0.0
    %1924 = vmatpush1.msra.mxu0 %v90
    %1925 = vmatprep.subr.mxu0 0.0
    %1926 = vmatpush1.msra.mxu0 %v89
    %1927 = vmatprep.subr.mxu0 0.0
    %1928 = vmatpush1.msra.mxu0 %v88
    %1929 = vmatprep.subr.mxu0 0.0
    %1930 = vmatpush1.msra.mxu0 %v87
    %1931 = vmatprep.subr.mxu0 0.0
    %1932 = vmatpush1.msra.mxu0 %v86
    %1933 = vmatprep.subr.mxu0 0.0
    %1934 = vmatpush1.msra.mxu0 %v85
    %1935 = vmatprep.subr.mxu0 0.0
    %1936 = vmatpush1.msra.mxu0 %v84
    %1937 = vmatprep.subr.mxu0 0.0
    %1938 = vmatpush2.msra.mxu0 %v115
    %1939 = vmatprep.subr.mxu0 0.0
    %1940 = vmatpush2.msra.mxu0 %v114
    %1941 = vmatprep.subr.mxu0 0.0
    %1942 = vmatpush2.msra.mxu0 %v113
    %1943 = vmatprep.subr.mxu0 0.0
    %1944 = vmatpush2.msra.mxu0 %v112
    %1945 = vmatprep.subr.mxu0 0.0
    %1946 = vmatpush2.msra.mxu0 %v111
    %1947 = vmatprep.subr.mxu0 0.0
    %1948 = vmatpush2.msra.mxu0 %v110
    %1949 = vmatprep.subr.mxu0 0.0
    %1950 = vmatpush2.msra.mxu0 %v109
    %1951 = vmatprep.subr.mxu0 0.0
    %1952 = vmatpush2.msra.mxu0 %v108
    %1953 = vmatprep.subr.mxu0 0.0
    %1954 = vmatpush2.msra.mxu0 %v107
    %1955 = vmatprep.subr.mxu0 0.0
    %1956 = vmatpush2.msra.mxu0 %v106
    %1957 = vmatprep.subr.mxu0 0.0
    %1958 = vmatpush2.msra.mxu0 %v105
    %1959 = vmatprep.subr.mxu0 0.0
    %1960 = vmatpush2.msra.mxu0 %v104
    %1961 = vmatprep.subr.mxu0 0.0
    %1962 = vmatpush2.msra.mxu0 %v103
    %1963 = vmatprep.subr.mxu0 0.0
    %1964 = vmatpush2.msra.mxu0 %v102
    %1965 = vmatprep.subr.mxu0 0.0
    %1966 = vmatpush2.msra.mxu0 %v101
    %1967 = vmatprep.subr.mxu0 0.0
    %1968 = vmatpush2.msra.mxu0 %v100
    %1969 = vmatprep.mubr.f32.mxu0 %v1886
    %1970 = vmatmul.mubr.f32.gmra.mxu0 %v1879
    %v1971 = vpop.f32.mrf.mxu0
    %v1972 = vadd.f32 0.0, %v1971
    %v1973 = vpop.f32.mrf.mxu0
    %1974 = vdwg.mxu0
    %1975 = vmatprep.subr.mxu0 0.0
    %1976 = vmatpush1.msra.mxu0 %v99
    %1977 = vmatprep.subr.mxu0 0.0
    %1978 = vmatpush1.msra.mxu0 %v98
    %1979 = vmatprep.subr.mxu0 0.0
    %1980 = vmatpush1.msra.mxu0 %v97
    %1981 = vmatprep.subr.mxu0 0.0
    %1982 = vmatpush1.msra.mxu0 %v96
    %1983 = vmatprep.subr.mxu0 0.0
    %1984 = vmatpush1.msra.mxu0 %v95
    %1985 = vmatprep.subr.mxu0 0.0
    %1986 = vmatpush1.msra.mxu0 %v94
    %1987 = vmatprep.subr.mxu0 0.0
    %1988 = vmatpush1.msra.mxu0 %v93
    %1989 = vmatprep.subr.mxu0 0.0
    %1990 = vmatpush1.msra.mxu0 %v92
    %1991 = vmatprep.subr.mxu0 0.0
    %1992 = vmatpush1.msra.mxu0 %v91
    %1993 = vmatprep.subr.mxu0 0.0
    %1994 = vmatpush1.msra.mxu0 %v90
    %1995 = vmatprep.subr.mxu0 0.0
    %1996 = vmatpush1.msra.mxu0 %v89
    %1997 = vmatprep.subr.mxu0 0.0
    %1998 = vmatpush1.msra.mxu0 %v88
    %1999 = vmatprep.subr.mxu0 0.0
    %2000 = vmatpush1.msra.mxu0 %v87
    %2001 = vmatprep.subr.mxu0 0.0
    %2002 = vmatpush1.msra.mxu0 %v86
    %2003 = vmatprep.subr.mxu0 0.0
    %2004 = vmatpush1.msra.mxu0 %v85
    %2005 = vmatprep.subr.mxu0 0.0
    %2006 = vmatpush1.msra.mxu0 %v84
    %2007 = vmatprep.subr.mxu0 0.0
    %2008 = vmatpush2.msra.mxu0 %v115
    %2009 = vmatprep.subr.mxu0 0.0
    %2010 = vmatpush2.msra.mxu0 %v114
    %2011 = vmatprep.subr.mxu0 0.0
    %2012 = vmatpush2.msra.mxu0 %v113
    %2013 = vmatprep.subr.mxu0 0.0
    %2014 = vmatpush2.msra.mxu0 %v112
    %2015 = vmatprep.subr.mxu0 0.0
    %2016 = vmatpush2.msra.mxu0 %v111
    %2017 = vmatprep.subr.mxu0 0.0
    %2018 = vmatpush2.msra.mxu0 %v110
    %2019 = vmatprep.subr.mxu0 0.0
    %2020 = vmatpush2.msra.mxu0 %v109
    %2021 = vmatprep.subr.mxu0 0.0
    %2022 = vmatpush2.msra.mxu0 %v108
    %2023 = vmatprep.subr.mxu0 0.0
    %2024 = vmatpush2.msra.mxu0 %v107
    %2025 = vmatprep.subr.mxu0 0.0
    %2026 = vmatpush2.msra.mxu0 %v106
    %2027 = vmatprep.subr.mxu0 0.0
    %2028 = vmatpush2.msra.mxu0 %v105
    %2029 = vmatprep.subr.mxu0 0.0
    %2030 = vmatpush2.msra.mxu0 %v104
    %2031 = vmatprep.subr.mxu0 0.0
    %2032 = vmatpush2.msra.mxu0 %v103
    %2033 = vmatprep.subr.mxu0 0.0
    %2034 = vmatpush2.msra.mxu0 %v102
    %2035 = vmatprep.subr.mxu0 0.0
    %2036 = vmatpush2.msra.mxu0 %v101
    %2037 = vmatprep.subr.mxu0 0.0
    %2038 = vmatpush2.msra.mxu0 %v100
    %2039 = vmatprep.mubr.f32.mxu0 %v1904
    %2040 = vmatmul.mubr.f32.gmra.mxu0 %v1897
    %v2041 = vpop.f32.mrf.mxu0
    %v2042 = vadd.f32 0.0, %v2041
    %v2043 = vpop.f32.mrf.mxu0
    %2044 = vdwg.mxu0
    %v2045 = vmul.f32 %v1972, %v477
    %v2046 = vmul.f32 %v2042, %v477
    %v2047 = vmul.f32 %v2045, %v2045
    %v2048 = vsub.f32 %v2046, %v2047
    %v2049 = vmax.f32 %v2048, 0.0
    %v2050 = vadd.f32 %v2049, 1e-05
    %v2051 = vrsqrt.pop %v2050
    %v2052 = vmul.f32 %v1871, %v2051
    %v2053 = vmul.f32 %v2045, %v2052
    %v2054 = vsub.f32 %v1872, %v2053
    %v2056 = vsel %vm488, %v2052, 0
    %2058 = vmatprep.subr.mxu0 0.0
    %2059 = vmatpush1.msra.mxu0 0.0
    %2060 = vmatprep.subr.mxu0 0.0
    %2061 = vmatpush1.msra.mxu0 0.0
    %2062 = vmatprep.subr.mxu0 0.0
    %2063 = vmatpush1.msra.mxu0 0.0
    %2064 = vmatprep.subr.mxu0 0.0
    %2065 = vmatpush1.msra.mxu0 0.0
    %2066 = vmatprep.subr.mxu0 0.0
    %2067 = vmatpush1.msra.mxu0 0.0
    %2068 = vmatprep.subr.mxu0 0.0
    %2069 = vmatpush1.msra.mxu0 0.0
    %2070 = vmatprep.subr.mxu0 0.0
    %2071 = vmatpush1.msra.mxu0 0.0
    %2072 = vmatprep.subr.mxu0 0.0
    %2073 = vmatpush1.msra.mxu0 0.0
    %2074 = vmatprep.subr.mxu0 0.0
    %2075 = vmatpush1.msra.mxu0 0.0
    %2076 = vmatprep.subr.mxu0 0.0
    %2077 = vmatpush1.msra.mxu0 0.0
    %2078 = vmatprep.subr.mxu0 0.0
    %2079 = vmatpush1.msra.mxu0 0.0
    %2080 = vmatprep.subr.mxu0 0.0
    %2081 = vmatpush1.msra.mxu0 0.0
    %2082 = vmatprep.subr.mxu0 %v123
    %2083 = vmatpush1.msra.mxu0 %v122
    %2084 = vmatprep.subr.mxu0 %v121
    %2085 = vmatpush1.msra.mxu0 %v120
    %2086 = vmatprep.subr.mxu0 %v119
    %2087 = vmatpush1.msra.mxu0 %v118
    %2088 = vmatprep.subr.mxu0 %v117
    %2089 = vmatpush1.msra.mxu0 %v116
    %2090 = vmatprep.subr.mxu0 0.0
    %2091 = vmatpush2.msra.mxu0 0.0
    %2092 = vmatprep.subr.mxu0 0.0
    %2093 = vmatpush2.msra.mxu0 0.0
    %2094 = vmatprep.subr.mxu0 0.0
    %2095 = vmatpush2.msra.mxu0 0.0
    %2096 = vmatprep.subr.mxu0 0.0
    %2097 = vmatpush2.msra.mxu0 0.0
    %2098 = vmatprep.subr.mxu0 0.0
    %2099 = vmatpush2.msra.mxu0 0.0
    %2100 = vmatprep.subr.mxu0 0.0
    %2101 = vmatpush2.msra.mxu0 0.0
    %2102 = vmatprep.subr.mxu0 0.0
    %2103 = vmatpush2.msra.mxu0 0.0
    %2104 = vmatprep.subr.mxu0 0.0
    %2105 = vmatpush2.msra.mxu0 0.0
    %2106 = vmatprep.subr.mxu0 0.0
    %2107 = vmatpush2.msra.mxu0 0.0
    %2108 = vmatprep.subr.mxu0 0.0
    %2109 = vmatpush2.msra.mxu0 0.0
    %2110 = vmatprep.subr.mxu0 0.0
    %2111 = vmatpush2.msra.mxu0 0.0
    %2112 = vmatprep.subr.mxu0 0.0
    %2113 = vmatpush2.msra.mxu0 0.0
    %2114 = vmatprep.subr.mxu0 0.0
    %2115 = vmatpush2.msra.mxu0 0.0
    %2116 = vmatprep.subr.mxu0 0.0
    %2117 = vmatpush2.msra.mxu0 0.0
    %2118 = vmatprep.subr.mxu0 0.0
    %2119 = vmatpush2.msra.mxu0 0.0
    %2120 = vmatprep.subr.mxu0 0.0
    %2121 = vmatpush2.msra.mxu0 0.0
    %2122 = vmatprep.mubr.f32.mxu0 0.0
    %2123 = vmatmul.mubr.f32.gmra.mxu0 %v2056
    %v2124 = vpop.f32.mrf.mxu0
    %v2125 = vadd.f32 0.0, %v2124
    %v2126 = vpop.f32.mrf.mxu0
    %v2127 = vadd.f32 0.0, %v2126
    %2128 = vdwg.mxu0
    %v2130 = vsel %vm488, %v2054, 0
    %2132 = vmatprep.subr.mxu0 0.0
    %2133 = vmatpush1.msra.mxu0 0.0
    %2134 = vmatprep.subr.mxu0 0.0
    %2135 = vmatpush1.msra.mxu0 0.0
    %2136 = vmatprep.subr.mxu0 0.0
    %2137 = vmatpush1.msra.mxu0 0.0
    %2138 = vmatprep.subr.mxu0 0.0
    %2139 = vmatpush1.msra.mxu0 0.0
    %2140 = vmatprep.subr.mxu0 0.0
    %2141 = vmatpush1.msra.mxu0 0.0
    %2142 = vmatprep.subr.mxu0 0.0
    %2143 = vmatpush1.msra.mxu0 0.0
    %2144 = vmatprep.subr.mxu0 0.0
    %2145 = vmatpush1.msra.mxu0 0.0
    %2146 = vmatprep.subr.mxu0 0.0
    %2147 = vmatpush1.msra.mxu0 0.0
    %2148 = vmatprep.subr.mxu0 0.0
    %2149 = vmatpush1.msra.mxu0 0.0
    %2150 = vmatprep.subr.mxu0 0.0
    %2151 = vmatpush1.msra.mxu0 0.0
    %2152 = vmatprep.subr.mxu0 0.0
    %2153 = vmatpush1.msra.mxu0 0.0
    %2154 = vmatprep.subr.mxu0 0.0
    %2155 = vmatpush1.msra.mxu0 0.0
    %2156 = vmatprep.subr.mxu0 %v123
    %2157 = vmatpush1.msra.mxu0 %v122
    %2158 = vmatprep.subr.mxu0 %v121
    %2159 = vmatpush1.msra.mxu0 %v120
    %2160 = vmatprep.subr.mxu0 %v119
    %2161 = vmatpush1.msra.mxu0 %v118
    %2162 = vmatprep.subr.mxu0 %v117
    %2163 = vmatpush1.msra.mxu0 %v116
    %2164 = vmatprep.subr.mxu0 0.0
    %2165 = vmatpush2.msra.mxu0 0.0
    %2166 = vmatprep.subr.mxu0 0.0
    %2167 = vmatpush2.msra.mxu0 0.0
    %2168 = vmatprep.subr.mxu0 0.0
    %2169 = vmatpush2.msra.mxu0 0.0
    %2170 = vmatprep.subr.mxu0 0.0
    %2171 = vmatpush2.msra.mxu0 0.0
    %2172 = vmatprep.subr.mxu0 0.0
    %2173 = vmatpush2.msra.mxu0 0.0
    %2174 = vmatprep.subr.mxu0 0.0
    %2175 = vmatpush2.msra.mxu0 0.0
    %2176 = vmatprep.subr.mxu0 0.0
    %2177 = vmatpush2.msra.mxu0 0.0
    %2178 = vmatprep.subr.mxu0 0.0
    %2179 = vmatpush2.msra.mxu0 0.0
    %2180 = vmatprep.subr.mxu0 0.0
    %2181 = vmatpush2.msra.mxu0 0.0
    %2182 = vmatprep.subr.mxu0 0.0
    %2183 = vmatpush2.msra.mxu0 0.0
    %2184 = vmatprep.subr.mxu0 0.0
    %2185 = vmatpush2.msra.mxu0 0.0
    %2186 = vmatprep.subr.mxu0 0.0
    %2187 = vmatpush2.msra.mxu0 0.0
    %2188 = vmatprep.subr.mxu0 0.0
    %2189 = vmatpush2.msra.mxu0 0.0
    %2190 = vmatprep.subr.mxu0 0.0
    %2191 = vmatpush2.msra.mxu0 0.0
    %2192 = vmatprep.subr.mxu0 0.0
    %2193 = vmatpush2.msra.mxu0 0.0
    %2194 = vmatprep.subr.mxu0 0.0
    %2195 = vmatpush2.msra.mxu0 0.0
    %2196 = vmatprep.mubr.f32.mxu0 0.0
    %2197 = vmatmul.mubr.f32.gmra.mxu0 %v2130
    %v2198 = vpop.f32.mrf.mxu0
    %v2199 = vadd.f32 0.0, %v2198
    %v2200 = vpop.f32.mrf.mxu0
    %v2201 = vadd.f32 0.0, %v2200
    %2202 = vdwg.mxu0
    %v2203 = vlaneseq
    %v2204 = vshrl.u32 %v2203, 7
    %v2205 = vsub.s32 0, %v2204
    %v2206 = vrot.slane %v2125, %v2205
    %v2207 = vlaneseq
    %v2208 = vshrl.u32 %v2207, 7
    %v2209 = vsub.s32 0, %v2208
    %v2210 = vrot.slane %v2127, %v2209
    %v2211 = vmul.f32 %v1867, %v2206
    %v2212 = vmul.f32 %v1868, %v2210
    %v2213 = vmul.f32 %v1869, %v2206
    %v2214 = vmul.f32 %v1870, %v2210
    %v2215 = vlaneseq
    %v2216 = vshrl.u32 %v2215, 7
    %v2217 = vsub.s32 0, %v2216
    %v2218 = vrot.slane %v2199, %v2217
    %v2219 = vlaneseq
    %v2220 = vshrl.u32 %v2219, 7
    %v2221 = vsub.s32 0, %v2220
    %v2222 = vrot.slane %v2201, %v2221
    %v2223 = vadd.f32 %v2211, %v2218
    %v2224 = vadd.f32 %v2212, %v2222
    %v2225 = vadd.f32 %v2213, %v2218
    %v2226 = vadd.f32 %v2214, %v2222
    %2227 = vmatprep.subr.mxu0 0.0
    %2228 = vmatpush1.msra.mxu0 %v99
    %2229 = vmatprep.subr.mxu0 0.0
    %2230 = vmatpush1.msra.mxu0 %v98
    %2231 = vmatprep.subr.mxu0 0.0
    %2232 = vmatpush1.msra.mxu0 %v97
    %2233 = vmatprep.subr.mxu0 0.0
    %2234 = vmatpush1.msra.mxu0 %v96
    %2235 = vmatprep.subr.mxu0 0.0
    %2236 = vmatpush1.msra.mxu0 %v95
    %2237 = vmatprep.subr.mxu0 0.0
    %2238 = vmatpush1.msra.mxu0 %v94
    %2239 = vmatprep.subr.mxu0 0.0
    %2240 = vmatpush1.msra.mxu0 %v93
    %2241 = vmatprep.subr.mxu0 0.0
    %2242 = vmatpush1.msra.mxu0 %v92
    %2243 = vmatprep.subr.mxu0 0.0
    %2244 = vmatpush1.msra.mxu0 %v91
    %2245 = vmatprep.subr.mxu0 0.0
    %2246 = vmatpush1.msra.mxu0 %v90
    %2247 = vmatprep.subr.mxu0 0.0
    %2248 = vmatpush1.msra.mxu0 %v89
    %2249 = vmatprep.subr.mxu0 0.0
    %2250 = vmatpush1.msra.mxu0 %v88
    %2251 = vmatprep.subr.mxu0 0.0
    %2252 = vmatpush1.msra.mxu0 %v87
    %2253 = vmatprep.subr.mxu0 0.0
    %2254 = vmatpush1.msra.mxu0 %v86
    %2255 = vmatprep.subr.mxu0 0.0
    %2256 = vmatpush1.msra.mxu0 %v85
    %2257 = vmatprep.subr.mxu0 0.0
    %2258 = vmatpush1.msra.mxu0 %v84
    %2259 = vmatprep.subr.mxu0 0.0
    %2260 = vmatpush2.msra.mxu0 %v115
    %2261 = vmatprep.subr.mxu0 0.0
    %2262 = vmatpush2.msra.mxu0 %v114
    %2263 = vmatprep.subr.mxu0 0.0
    %2264 = vmatpush2.msra.mxu0 %v113
    %2265 = vmatprep.subr.mxu0 0.0
    %2266 = vmatpush2.msra.mxu0 %v112
    %2267 = vmatprep.subr.mxu0 0.0
    %2268 = vmatpush2.msra.mxu0 %v111
    %2269 = vmatprep.subr.mxu0 0.0
    %2270 = vmatpush2.msra.mxu0 %v110
    %2271 = vmatprep.subr.mxu0 0.0
    %2272 = vmatpush2.msra.mxu0 %v109
    %2273 = vmatprep.subr.mxu0 0.0
    %2274 = vmatpush2.msra.mxu0 %v108
    %2275 = vmatprep.subr.mxu0 0.0
    %2276 = vmatpush2.msra.mxu0 %v107
    %2277 = vmatprep.subr.mxu0 0.0
    %2278 = vmatpush2.msra.mxu0 %v106
    %2279 = vmatprep.subr.mxu0 0.0
    %2280 = vmatpush2.msra.mxu0 %v105
    %2281 = vmatprep.subr.mxu0 0.0
    %2282 = vmatpush2.msra.mxu0 %v104
    %2283 = vmatprep.subr.mxu0 0.0
    %2284 = vmatpush2.msra.mxu0 %v103
    %2285 = vmatprep.subr.mxu0 0.0
    %2286 = vmatpush2.msra.mxu0 %v102
    %2287 = vmatprep.subr.mxu0 0.0
    %2288 = vmatpush2.msra.mxu0 %v101
    %2289 = vmatprep.subr.mxu0 0.0
    %2290 = vmatpush2.msra.mxu0 %v100
    %2291 = vmatprep.mubr.f32.mxu0 %v2224
    %2292 = vmatmul.mubr.f32.gmra.mxu0 %v2223
    %v2293 = vpop.f32.mrf.mxu0
    %v2294 = vadd.f32 0.0, %v2293
    %v2295 = vpop.f32.mrf.mxu0
    %2296 = vmatprep.mubr.f32.mxu0 %v2226
    %2297 = vmatmul.mubr.f32.gmra.mxu0 %v2225
    %v2298 = vpop.f32.mrf.mxu0
    %v2299 = vadd.f32 0.0, %v2298
    %v2300 = vpop.f32.mrf.mxu0
    %2301 = vdwg.mxu0
    %v2302 = vmul.f32 %v2294, 0.125
    %v2303 = vmul.f32 %v2299, 0.125
    %2304 = vst.msk [vmem:[#allocation11] sm:$0xff] %vm488, %v2302
    %2305 = vst.msk [vmem:[#allocation11 + $0x8] sm:$0xff] %vm488, %v2303
    // Predicated region
    $region69: #{tpu_custom_call.1} parent=1 // pred_check
      _
    $region70: #{tpu_custom_call.1} parent=1 // pred_check_branch
      %2307 = sbr.rel (0) target = $region72
    $region71: #{tpu_custom_call.1} parent=1 // pred_region
      %s2309 = ssub.s32 256, 256
      %2310 = vsyncadd [#allocation6], %s2309
      %s2311 = sshll.u32 [#allocation11], 4
      %s2312 = int_to_ptr.vmem [resolvable:$true] %s2311
      %2317 = dma.vmem_to_hbm [thread:$0]  %s2312, 256, %s12, [#allocation6], 128, 128, 8
    $region72: #{tpu_custom_call.1} parent=1 // pred_fallthru
      _
    // Predicated region
    $region73: #{tpu_custom_call.1} parent=1 // pred_check
      _
    $region74: #{tpu_custom_call.1} parent=1 // pred_check_branch
      %2319 = sbr.rel (0) target = $region76
    $region75: #{tpu_custom_call.1} parent=1 // pred_region
      %2320 = dma.done [#allocation6], 256
    $region76: #{tpu_custom_call.1} parent=1 // pred_fallthru
      _
    %2321 = vsyncpa [#allocation5], 1
    %2322 = vsyncpa [#allocation9], 1
    %2323 = vsyncpa [#allocation6], 1
    %2324 = vsyncpa [#allocation7], 1

</llo_original>
